<compile_context>
chip_gen: v5e
topology: v5e:2x2
jax: 0.10.0
libtpu: 0.0.40
codegen_flags: <defaults>
</compile_context>

<pallas_src>
import jax
import jax.numpy as jnp
from jax.experimental import pallas as pl
from jax.experimental.pallas import tpu as pltpu

# ----- small, BERT-like synthetic sizes ------------------------------------
B = 8          # batch of "texts"
S = 8          # sequence length (stand-in for max_length=512)
H = 32         # hidden size (== GraphSAGE input_dim)
F = 64         # FFN intermediate size
HID = 32       # GraphSAGE hidden_dim
OUT = 16       # GraphSAGE output_dim
OUT_PAD = 128  # lane-dense padded output width
QKV_PAD = 128  # fused QKV weight padded to full lane width (3*H = 96 used)
VOCAB = 128
LANE = 128
NVEC = 9       # packed bias / LayerNorm vector rows


# ---------------------------------------------------------------------------
# Fused kernel (single grid step, whole batch):
#   BERT encoder layer (single head, masked softmax, residuals, LayerNorms,
#   GELU FFN) -> pooler tanh(Linear(h[CLS])) -> 2-layer GraphSAGE head.
# ---------------------------------------------------------------------------
def fused_kernel(x_ref, mask_ref,
                 wqkv_ref, wo_ref, w1_ref, w2_ref,
                 wp_ref, ws1_ref, ws2_ref, vec_ref,
                 out_ref):
    bf = jnp.bfloat16
    x = x_ref[...]                      # [B, S, H] f32
    mask = mask_ref[...]                # [B, 1, S] f32 (1.0 = attend, 0 = pad)
    vecs = vec_ref[...]                 # [NVEC, LANE] packed f32 vectors

    ln1_g = vecs[0:1, :H]
    ln1_b = vecs[1:2, :H]
    ln2_g = vecs[2:3, :H]
    ln2_b = vecs[3:4, :H]
    b1 = vecs[4:5, :F]
    b2 = vecs[5:6, :H]
    bp = vecs[6:7, :H]
    sb1 = vecs[7:8, :HID]
    sb2 = vecs[8:9, :OUT_PAD]

    x_flat = x.reshape(B * S, H)        # [64, 32]

    # --- fused QKV projection: one [64,32] x [32,128] bf16 matmul -----------
    # (1/sqrt(H) pre-folded into the Wq columns)
    qkv = jnp.dot(x_flat.astype(bf), wqkv_ref[...],
                  preferred_element_type=jnp.float32)        # [B*S, 128]
    q = qkv[:, 0:H].reshape(B, S, H)
    k = qkv[:, H:2 * H].reshape(B, S, H)
    v = qkv[:, 2 * H:3 * H].reshape(B, S, H)

    # --- batched single-head attention --------------------------------------
    scores = jnp.einsum('bqd,bkd->bqk', q.astype(bf), k.astype(bf),
                        preferred_element_type=jnp.float32)  # [B, S, S]
    scores = scores + (jnp.float32(1.0) - mask) * jnp.float32(-1e9)
    scores = scores - scores.max(axis=-1, keepdims=True)
    p = jnp.exp(scores)
    p = p * pl.reciprocal(p.sum(axis=-1, keepdims=True), approx=True)

    attn = jnp.einsum('bqk,bkd->bqd', p.astype(bf), v.astype(bf),
                      preferred_element_type=jnp.float32)    # [B, S, H]
    attn_flat = jnp.dot(attn.reshape(B * S, H).astype(bf), wo_ref[...],
                        preferred_element_type=jnp.float32)  # [64, 32]

    # --- residual + LayerNorm 1 ----------------------------------------------
    h = x_flat + attn_flat
    mu = jnp.mean(h, axis=-1, keepdims=True)
    var = jnp.mean((h - mu) * (h - mu), axis=-1, keepdims=True)
    h = (h - mu) * jax.lax.rsqrt(var + jnp.float32(1e-12)) * ln1_g + ln1_b

    # --- FFN (GELU) ----------------------------------------------------------
    f = jnp.dot(h.astype(bf), w1_ref[...],
                preferred_element_type=jnp.float32) + b1     # [64, F]
    # TODO(synk): HF BERT uses exact erf-GELU; tanh approximation kept here.
    f = jax.nn.gelu(f, approximate=True)
    f = jnp.dot(f.astype(bf), w2_ref[...],
                preferred_element_type=jnp.float32) + b2     # [64, H]

    # --- residual + LayerNorm 2 ----------------------------------------------
    h2 = h + f
    mu2 = jnp.mean(h2, axis=-1, keepdims=True)
    var2 = jnp.mean((h2 - mu2) * (h2 - mu2), axis=-1, keepdims=True)
    h2 = (h2 - mu2) * jax.lax.rsqrt(var2 + jnp.float32(1e-12)) * ln2_g + ln2_b

    # --- pooler: tanh(Linear(h[CLS])) ----------------------------------------
    h_cls = h2.reshape(B, S, H)[:, 0, :]                     # [B, H]
    pooled = jnp.tanh(
        jnp.dot(h_cls.astype(bf), wp_ref[...],
                preferred_element_type=jnp.float32) + bp)    # [B, H]

    # --- GraphSAGE head (single-node graph: neighbor aggregate == self, so
    #     W_self + W_neigh were pre-summed on the host) ------------------------
    g1 = jnp.dot(pooled.astype(bf), ws1_ref[...],
                 preferred_element_type=jnp.float32) + sb1
    g1 = jnp.maximum(g1, jnp.float32(0.0))                   # [B, HID]
    g2 = jnp.dot(g1.astype(bf), ws2_ref[...],
                 preferred_element_type=jnp.float32) + sb2   # [B, OUT_PAD]

    # single [8, 128] store == one full f32 vreg, one unmasked vst
    out_ref[...] = g2


def _full_spec(shape):
    """Whole-array block, single grid step."""
    nd = len(shape)
    return pl.BlockSpec(shape, lambda i, nd=nd: (0,) * nd)


def galactic_nlp_forward(input_ids, params):
    """input_ids: int32 [B, S] (token id 0 == padding). Returns f32 [B, OUT]."""
    # embedding lookup + mask build (glue, JAX)
    x = params["tok_emb"][input_ids] + params["pos_emb"][None]        # [B, S, H]
    mask = (input_ids != 0).astype(jnp.float32)[:, None, :]           # [B, 1, S]

    weight_args = (params["wqkv"], params["wo"], params["w1"], params["w2"],
                   params["wp"], params["ws1"], params["ws2"], params["vecs"])

    out = pl.pallas_call(
        fused_kernel,
        out_shape=jax.ShapeDtypeStruct((B, OUT_PAD), jnp.float32),
        grid=(1,),
        in_specs=[_full_spec((B, S, H)), _full_spec((B, 1, S))]
                 + [_full_spec(a.shape) for a in weight_args],
        out_specs=pl.BlockSpec((B, OUT_PAD), lambda i: (0, 0)),
        compiler_params=pltpu.CompilerParams(
            dimension_semantics=("arbitrary",)),
    )(x, mask, *weight_args)

    return out[:, :OUT]                                               # [B, OUT]


# ---------------------------------------------------------------------------
# Deterministic synthetic parameters (packed / padded for the fused kernel)
# ---------------------------------------------------------------------------
def init_params(key):
    ks = jax.random.split(key, 13)
    s = 0.05

    def n(i, shp):
        return s * jax.random.normal(ks[i], shp, jnp.float32)

    wq, wk, wv, wo = n(0, (H, H)), n(1, (H, H)), n(2, (H, H)), n(3, (H, H))
    w1, w2 = n(4, (H, F)), n(5, (F, H))
    wp = n(6, (H, H))
    ws1_self, ws1_neigh = n(7, (H, HID)), n(8, (H, HID))
    ws2_self, ws2_neigh = n(9, (HID, OUT)), n(10, (HID, OUT))
    tok_emb = n(11, (VOCAB, H))
    pos_emb = n(12, (S, H))

    # fused QKV weight [H, 128]: cols 0:32 Wq*(1/sqrt(H)) | 32:64 Wk | 64:96 Wv
    scale = jnp.float32(H) ** jnp.float32(-0.5)
    wqkv = jnp.zeros((H, QKV_PAD), jnp.float32)
    wqkv = wqkv.at[:, 0:H].set(wq * scale)
    wqkv = wqkv.at[:, H:2 * H].set(wk)
    wqkv = wqkv.at[:, 2 * H:3 * H].set(wv)

    # GraphSAGE: single-node graph => self + neighbor weights pre-summed;
    # second layer zero-padded to OUT_PAD lanes for a dense output store.
    ws1 = ws1_self + ws1_neigh                                        # [H, HID]
    ws2 = jnp.zeros((HID, OUT_PAD), jnp.float32).at[:, :OUT].set(
        ws2_self + ws2_neigh)                                         # [HID, 128]

    # packed bias / LayerNorm vectors: one [NVEC, LANE] f32 array
    # rows: 0 ln1_g | 1 ln1_b | 2 ln2_g | 3 ln2_b | 4 b1 | 5 b2 | 6 bp
    #       7 sage_b1 | 8 sage_b2(pad)
    vecs = jnp.zeros((NVEC, LANE), jnp.float32)
    vecs = vecs.at[0, :H].set(1.0)   # ln1 gamma
    vecs = vecs.at[2, :H].set(1.0)   # ln2 gamma
    # all betas / biases stay zero (matches nn defaults)

    bf = jnp.bfloat16
    return {
        "tok_emb": tok_emb, "pos_emb": pos_emb,
        "wqkv": wqkv.astype(bf), "wo": wo.astype(bf),
        "w1": w1.astype(bf), "w2": w2.astype(bf), "wp": wp.astype(bf),
        "ws1": ws1.astype(bf), "ws2": ws2.astype(bf),
        "vecs": vecs,
    }


if __name__ == "__main__":
    key = jax.random.PRNGKey(0)
    pkey, dkey = jax.random.split(key)
    params = init_params(pkey)

    # deterministic synthetic "tokenized text": last two positions are padding
    ids = jax.random.randint(dkey, (B, S), 1, VOCAB, dtype=jnp.int32)
    ids = ids.at[:, S - 2:].set(0)

    out = jax.jit(galactic_nlp_forward)(ids, params)
    jax.block_until_ready(out)
    assert out.shape == (B, OUT) and out.dtype == jnp.float32
    assert bool(jnp.all(jnp.isfinite(out)))
    print("KERNEL_OK")
</pallas_src>

<mosaic_0001>
module attributes {stable_mosaic.version = 11 : i64} {
  func.func @fused_kernel(%arg0: i32, %arg1: memref<8x8x32xf32, #tpu.memory_space<vmem>>, %arg2: memref<8x1x8xf32, #tpu.memory_space<vmem>>, %arg3: memref<32x128xbf16, #tpu.memory_space<vmem>>, %arg4: memref<32x32xbf16, #tpu.memory_space<vmem>>, %arg5: memref<32x64xbf16, #tpu.memory_space<vmem>>, %arg6: memref<64x32xbf16, #tpu.memory_space<vmem>>, %arg7: memref<32x32xbf16, #tpu.memory_space<vmem>>, %arg8: memref<32x32xbf16, #tpu.memory_space<vmem>>, %arg9: memref<32x128xbf16, #tpu.memory_space<vmem>>, %arg10: memref<9x128xf32, #tpu.memory_space<vmem>>, %arg11: memref<8x128xf32, #tpu.memory_space<vmem>>) attributes {dimension_semantics = [#tpu.dimension_semantics<arbitrary>], iteration_bounds = array<i64: 1>, scalar_prefetch = 0 : i64, scratch_operands = 0 : i64, tpu.core_type = #tpu.core_type<tc>, window_params = [{pipeline_mode = #tpu.pipeline_mode<synchronous>, transform_indices = @transform_0, window_bounds = array<i64: 8, 8, 32>}, {pipeline_mode = #tpu.pipeline_mode<synchronous>, transform_indices = @transform_1, window_bounds = array<i64: 8, 1, 8>}, {pipeline_mode = #tpu.pipeline_mode<synchronous>, transform_indices = @transform_2, window_bounds = array<i64: 32, 128>}, {pipeline_mode = #tpu.pipeline_mode<synchronous>, transform_indices = @transform_3, window_bounds = array<i64: 32, 32>}, {pipeline_mode = #tpu.pipeline_mode<synchronous>, transform_indices = @transform_4, window_bounds = array<i64: 32, 64>}, {pipeline_mode = #tpu.pipeline_mode<synchronous>, transform_indices = @transform_5, window_bounds = array<i64: 64, 32>}, {pipeline_mode = #tpu.pipeline_mode<synchronous>, transform_indices = @transform_6, window_bounds = array<i64: 32, 32>}, {pipeline_mode = #tpu.pipeline_mode<synchronous>, transform_indices = @transform_7, window_bounds = array<i64: 32, 32>}, {pipeline_mode = #tpu.pipeline_mode<synchronous>, transform_indices = @transform_8, window_bounds = array<i64: 32, 128>}, {pipeline_mode = #tpu.pipeline_mode<synchronous>, transform_indices = @transform_9, window_bounds = array<i64: 9, 128>}, {pipeline_mode = #tpu.pipeline_mode<synchronous>, transform_indices = @transform_10, window_bounds = array<i64: 8, 128>}]} {
    %c0 = arith.constant 0 : index
    %c0_0 = arith.constant 0 : index
    %c0_1 = arith.constant 0 : index
    %0 = vector.load %arg1[%c0, %c0_0, %c0_1] : memref<8x8x32xf32, #tpu.memory_space<vmem>>, vector<8x8x32xf32>
    %c0_2 = arith.constant 0 : index
    %c0_3 = arith.constant 0 : index
    %c0_4 = arith.constant 0 : index
    %1 = vector.load %arg2[%c0_2, %c0_3, %c0_4] : memref<8x1x8xf32, #tpu.memory_space<vmem>>, vector<8x1x8xf32>
    %c0_5 = arith.constant 0 : index
    %c0_6 = arith.constant 0 : index
    %2 = vector.load %arg10[%c0_5, %c0_6] : memref<9x128xf32, #tpu.memory_space<vmem>>, vector<9x128xf32>
    %3 = vector.extract_strided_slice %2 {offsets = [0, 0], sizes = [1, 32], strides = [1, 1]} : vector<9x128xf32> to vector<1x32xf32>
    %4 = vector.extract_strided_slice %2 {offsets = [1, 0], sizes = [1, 32], strides = [1, 1]} : vector<9x128xf32> to vector<1x32xf32>
    %5 = vector.extract_strided_slice %2 {offsets = [2, 0], sizes = [1, 32], strides = [1, 1]} : vector<9x128xf32> to vector<1x32xf32>
    %6 = vector.extract_strided_slice %2 {offsets = [3, 0], sizes = [1, 32], strides = [1, 1]} : vector<9x128xf32> to vector<1x32xf32>
    %7 = vector.extract_strided_slice %2 {offsets = [4, 0], sizes = [1, 64], strides = [1, 1]} : vector<9x128xf32> to vector<1x64xf32>
    %8 = vector.extract_strided_slice %2 {offsets = [5, 0], sizes = [1, 32], strides = [1, 1]} : vector<9x128xf32> to vector<1x32xf32>
    %9 = vector.extract_strided_slice %2 {offsets = [6, 0], sizes = [1, 32], strides = [1, 1]} : vector<9x128xf32> to vector<1x32xf32>
    %10 = vector.extract_strided_slice %2 {offsets = [7, 0], sizes = [1, 32], strides = [1, 1]} : vector<9x128xf32> to vector<1x32xf32>
    %11 = vector.extract_strided_slice %2 {offsets = [8, 0], sizes = [1, 128], strides = [1, 1]} : vector<9x128xf32> to vector<1x128xf32>
    %12 = vector.shape_cast %0 : vector<8x8x32xf32> to vector<64x32xf32>
    %13 = arith.truncf %12 : vector<64x32xf32> to vector<64x32xbf16>
    %c0_7 = arith.constant 0 : index
    %c0_8 = arith.constant 0 : index
    %14 = vector.load %arg3[%c0_7, %c0_8] : memref<32x128xbf16, #tpu.memory_space<vmem>>, vector<32x128xbf16>
    %cst = arith.constant dense<0.000000e+00> : vector<64x128xf32>
    %15 = tpu.matmul %13, %14, %cst {dimension_numbers = #tpu.dot_dimension_numbers<[1], [0], [0], [1], [0, 0, 1, 1], [], []>} : vector<64x32xbf16>, vector<32x128xbf16>, vector<64x128xf32> -> vector<64x128xf32>
    %16 = vector.extract_strided_slice %15 {offsets = [0, 0], sizes = [64, 32], strides = [1, 1]} : vector<64x128xf32> to vector<64x32xf32>
    %17 = vector.shape_cast %16 : vector<64x32xf32> to vector<8x8x32xf32>
    %18 = vector.extract_strided_slice %15 {offsets = [0, 32], sizes = [64, 32], strides = [1, 1]} : vector<64x128xf32> to vector<64x32xf32>
    %19 = vector.shape_cast %18 : vector<64x32xf32> to vector<8x8x32xf32>
    %20 = vector.extract_strided_slice %15 {offsets = [0, 64], sizes = [64, 32], strides = [1, 1]} : vector<64x128xf32> to vector<64x32xf32>
    %21 = vector.shape_cast %20 : vector<64x32xf32> to vector<8x8x32xf32>
    %22 = arith.truncf %17 : vector<8x8x32xf32> to vector<8x8x32xbf16>
    %23 = arith.truncf %19 : vector<8x8x32xf32> to vector<8x8x32xbf16>
    "tpu.trace_start"() <{level = 10 : i32, message = "bqd,bkd->bqk"}> : () -> ()
    %cst_9 = arith.constant dense<0.000000e+00> : vector<8x8x8xf32>
    %24 = tpu.matmul %22, %23, %cst_9 {dimension_numbers = #tpu.dot_dimension_numbers<[2], [2], [1], [1], [0, 0, 0, 1, 1, 1], [0], [0]>} : vector<8x8x32xbf16>, vector<8x8x32xbf16>, vector<8x8x8xf32> -> vector<8x8x8xf32>
    "tpu.trace_stop"() : () -> ()
    %cst_10 = arith.constant 1.000000e+00 : f32
    %25 = vector.broadcast %cst_10 : f32 to vector<8x1x8xf32>
    %26 = arith.subf %25, %1 : vector<8x1x8xf32>
    %cst_11 = arith.constant -1.000000e+09 : f32
    %27 = vector.broadcast %cst_11 : f32 to vector<8x1x8xf32>
    %28 = arith.mulf %26, %27 : vector<8x1x8xf32>
    %29 = vector.broadcast %28 : vector<8x1x8xf32> to vector<8x8x8xf32>
    %30 = arith.addf %24, %29 : vector<8x8x8xf32>
    %cst_12 = arith.constant dense<0xFF800000> : vector<8x8xf32>
    %31 = vector.multi_reduction <maximumf>, %30, %cst_12 [2] : vector<8x8x8xf32> to vector<8x8xf32>
    %32 = vector.shape_cast %31 : vector<8x8xf32> to vector<8x8x1xf32>
    %33 = vector.broadcast %32 : vector<8x8x1xf32> to vector<8x8x8xf32>
    %34 = arith.subf %30, %33 : vector<8x8x8xf32>
    %35 = math.exp %34 : vector<8x8x8xf32>
    %cst_13 = arith.constant dense<0.000000e+00> : vector<8x8xf32>
    %36 = vector.multi_reduction <add>, %35, %cst_13 [2] : vector<8x8x8xf32> to vector<8x8xf32>
    %37 = vector.shape_cast %36 : vector<8x8xf32> to vector<8x8x1xf32>
    %38 = tpu.reciprocal %37 {approx = true} : vector<8x8x1xf32> -> vector<8x8x1xf32>
    %39 = vector.broadcast %38 : vector<8x8x1xf32> to vector<8x8x8xf32>
    %40 = arith.mulf %35, %39 : vector<8x8x8xf32>
    %41 = arith.truncf %40 : vector<8x8x8xf32> to vector<8x8x8xbf16>
    %42 = arith.truncf %21 : vector<8x8x32xf32> to vector<8x8x32xbf16>
    "tpu.trace_start"() <{level = 10 : i32, message = "bqk,bkd->bqd"}> : () -> ()
    %cst_14 = arith.constant dense<0.000000e+00> : vector<8x8x32xf32>
    %43 = tpu.matmul %41, %42, %cst_14 {dimension_numbers = #tpu.dot_dimension_numbers<[2], [1], [1], [2], [0, 0, 0, 1, 1, 2], [0], [0]>} : vector<8x8x8xbf16>, vector<8x8x32xbf16>, vector<8x8x32xf32> -> vector<8x8x32xf32>
    "tpu.trace_stop"() : () -> ()
    %44 = vector.shape_cast %43 : vector<8x8x32xf32> to vector<64x32xf32>
    %45 = arith.truncf %44 : vector<64x32xf32> to vector<64x32xbf16>
    %c0_15 = arith.constant 0 : index
    %c0_16 = arith.constant 0 : index
    %46 = vector.load %arg4[%c0_15, %c0_16] : memref<32x32xbf16, #tpu.memory_space<vmem>>, vector<32x32xbf16>
    %cst_17 = arith.constant dense<0.000000e+00> : vector<64x32xf32>
    %47 = tpu.matmul %45, %46, %cst_17 {dimension_numbers = #tpu.dot_dimension_numbers<[1], [0], [0], [1], [0, 0, 1, 1], [], []>} : vector<64x32xbf16>, vector<32x32xbf16>, vector<64x32xf32> -> vector<64x32xf32>
    %48 = arith.addf %12, %47 : vector<64x32xf32>
    %cst_18 = arith.constant dense<0.000000e+00> : vector<64xf32>
    %49 = vector.multi_reduction <add>, %48, %cst_18 [1] : vector<64x32xf32> to vector<64xf32>
    %50 = vector.shape_cast %49 : vector<64xf32> to vector<64x1xf32>
    %cst_19 = arith.constant 3.200000e+01 : f32
    %51 = vector.broadcast %cst_19 : f32 to vector<64x1xf32>
    %52 = arith.divf %50, %51 : vector<64x1xf32>
    %53 = vector.broadcast %52 : vector<64x1xf32> to vector<64x32xf32>
    %54 = arith.subf %48, %53 : vector<64x32xf32>
    %55 = vector.broadcast %52 : vector<64x1xf32> to vector<64x32xf32>
    %56 = arith.subf %48, %55 : vector<64x32xf32>
    %57 = arith.mulf %54, %56 : vector<64x32xf32>
    %cst_20 = arith.constant dense<0.000000e+00> : vector<64xf32>
    %58 = vector.multi_reduction <add>, %57, %cst_20 [1] : vector<64x32xf32> to vector<64xf32>
    %59 = vector.shape_cast %58 : vector<64xf32> to vector<64x1xf32>
    %cst_21 = arith.constant 3.200000e+01 : f32
    %60 = vector.broadcast %cst_21 : f32 to vector<64x1xf32>
    %61 = arith.divf %59, %60 : vector<64x1xf32>
    %62 = vector.broadcast %52 : vector<64x1xf32> to vector<64x32xf32>
    %63 = arith.subf %48, %62 : vector<64x32xf32>
    %cst_22 = arith.constant 9.99999996E-13 : f32
    %64 = vector.broadcast %cst_22 : f32 to vector<64x1xf32>
    %65 = arith.addf %61, %64 : vector<64x1xf32>
    %66 = math.rsqrt %65 : vector<64x1xf32>
    %67 = vector.broadcast %66 : vector<64x1xf32> to vector<64x32xf32>
    %68 = arith.mulf %63, %67 : vector<64x32xf32>
    %69 = vector.broadcast %3 : vector<1x32xf32> to vector<64x32xf32>
    %70 = arith.mulf %68, %69 : vector<64x32xf32>
    %71 = vector.broadcast %4 : vector<1x32xf32> to vector<64x32xf32>
    %72 = arith.addf %70, %71 : vector<64x32xf32>
    %73 = arith.truncf %72 : vector<64x32xf32> to vector<64x32xbf16>
    %c0_23 = arith.constant 0 : index
    %c0_24 = arith.constant 0 : index
    %74 = vector.load %arg5[%c0_23, %c0_24] : memref<32x64xbf16, #tpu.memory_space<vmem>>, vector<32x64xbf16>
    %cst_25 = arith.constant dense<0.000000e+00> : vector<64x64xf32>
    %75 = tpu.matmul %73, %74, %cst_25 {dimension_numbers = #tpu.dot_dimension_numbers<[1], [0], [0], [1], [0, 0, 1, 1], [], []>} : vector<64x32xbf16>, vector<32x64xbf16>, vector<64x64xf32> -> vector<64x64xf32>
    %76 = vector.broadcast %7 : vector<1x64xf32> to vector<64x64xf32>
    %77 = arith.addf %75, %76 : vector<64x64xf32>
    %78 = arith.mulf %77, %77 : vector<64x64xf32>
    %79 = arith.mulf %77, %78 : vector<64x64xf32>
    %cst_26 = arith.constant 4.471500e-02 : f32
    %80 = vector.broadcast %cst_26 : f32 to vector<64x64xf32>
    %81 = arith.mulf %80, %79 : vector<64x64xf32>
    %82 = arith.addf %77, %81 : vector<64x64xf32>
    %cst_27 = arith.constant 0.797884583 : f32
    %83 = vector.broadcast %cst_27 : f32 to vector<64x64xf32>
    %84 = arith.mulf %83, %82 : vector<64x64xf32>
    %85 = math.tanh %84 : vector<64x64xf32>
    %cst_28 = arith.constant 1.000000e+00 : f32
    %86 = vector.broadcast %cst_28 : f32 to vector<64x64xf32>
    %87 = arith.addf %86, %85 : vector<64x64xf32>
    %cst_29 = arith.constant 5.000000e-01 : f32
    %88 = vector.broadcast %cst_29 : f32 to vector<64x64xf32>
    %89 = arith.mulf %88, %87 : vector<64x64xf32>
    %90 = arith.mulf %77, %89 : vector<64x64xf32>
    %91 = arith.truncf %90 : vector<64x64xf32> to vector<64x64xbf16>
    %c0_30 = arith.constant 0 : index
    %c0_31 = arith.constant 0 : index
    %92 = vector.load %arg6[%c0_30, %c0_31] : memref<64x32xbf16, #tpu.memory_space<vmem>>, vector<64x32xbf16>
    %cst_32 = arith.constant dense<0.000000e+00> : vector<64x32xf32>
    %93 = tpu.matmul %91, %92, %cst_32 {dimension_numbers = #tpu.dot_dimension_numbers<[1], [0], [0], [1], [0, 0, 1, 1], [], []>} : vector<64x64xbf16>, vector<64x32xbf16>, vector<64x32xf32> -> vector<64x32xf32>
    %94 = vector.broadcast %8 : vector<1x32xf32> to vector<64x32xf32>
    %95 = arith.addf %93, %94 : vector<64x32xf32>
    %96 = arith.addf %72, %95 : vector<64x32xf32>
    %cst_33 = arith.constant dense<0.000000e+00> : vector<64xf32>
    %97 = vector.multi_reduction <add>, %96, %cst_33 [1] : vector<64x32xf32> to vector<64xf32>
    %98 = vector.shape_cast %97 : vector<64xf32> to vector<64x1xf32>
    %cst_34 = arith.constant 3.200000e+01 : f32
    %99 = vector.broadcast %cst_34 : f32 to vector<64x1xf32>
    %100 = arith.divf %98, %99 : vector<64x1xf32>
    %101 = vector.broadcast %100 : vector<64x1xf32> to vector<64x32xf32>
    %102 = arith.subf %96, %101 : vector<64x32xf32>
    %103 = vector.broadcast %100 : vector<64x1xf32> to vector<64x32xf32>
    %104 = arith.subf %96, %103 : vector<64x32xf32>
    %105 = arith.mulf %102, %104 : vector<64x32xf32>
    %cst_35 = arith.constant dense<0.000000e+00> : vector<64xf32>
    %106 = vector.multi_reduction <add>, %105, %cst_35 [1] : vector<64x32xf32> to vector<64xf32>
    %107 = vector.shape_cast %106 : vector<64xf32> to vector<64x1xf32>
    %cst_36 = arith.constant 3.200000e+01 : f32
    %108 = vector.broadcast %cst_36 : f32 to vector<64x1xf32>
    %109 = arith.divf %107, %108 : vector<64x1xf32>
    %110 = vector.broadcast %100 : vector<64x1xf32> to vector<64x32xf32>
    %111 = arith.subf %96, %110 : vector<64x32xf32>
    %cst_37 = arith.constant 9.99999996E-13 : f32
    %112 = vector.broadcast %cst_37 : f32 to vector<64x1xf32>
    %113 = arith.addf %109, %112 : vector<64x1xf32>
    %114 = math.rsqrt %113 : vector<64x1xf32>
    %115 = vector.broadcast %114 : vector<64x1xf32> to vector<64x32xf32>
    %116 = arith.mulf %111, %115 : vector<64x32xf32>
    %117 = vector.broadcast %5 : vector<1x32xf32> to vector<64x32xf32>
    %118 = arith.mulf %116, %117 : vector<64x32xf32>
    %119 = vector.broadcast %6 : vector<1x32xf32> to vector<64x32xf32>
    %120 = arith.addf %118, %119 : vector<64x32xf32>
    %121 = vector.shape_cast %120 : vector<64x32xf32> to vector<8x8x32xf32>
    %122 = vector.extract_strided_slice %121 {offsets = [0, 0, 0], sizes = [8, 1, 32], strides = [1, 1, 1]} : vector<8x8x32xf32> to vector<8x1x32xf32>
    %123 = vector.shape_cast %122 : vector<8x1x32xf32> to vector<8x32xf32>
    %124 = arith.truncf %123 : vector<8x32xf32> to vector<8x32xbf16>
    %c0_38 = arith.constant 0 : index
    %c0_39 = arith.constant 0 : index
    %125 = vector.load %arg7[%c0_38, %c0_39] : memref<32x32xbf16, #tpu.memory_space<vmem>>, vector<32x32xbf16>
    %cst_40 = arith.constant dense<0.000000e+00> : vector<8x32xf32>
    %126 = tpu.matmul %124, %125, %cst_40 {dimension_numbers = #tpu.dot_dimension_numbers<[1], [0], [0], [1], [0, 0, 1, 1], [], []>} : vector<8x32xbf16>, vector<32x32xbf16>, vector<8x32xf32> -> vector<8x32xf32>
    %127 = vector.broadcast %9 : vector<1x32xf32> to vector<8x32xf32>
    %128 = arith.addf %126, %127 : vector<8x32xf32>
    %129 = math.tanh %128 : vector<8x32xf32>
    %130 = arith.truncf %129 : vector<8x32xf32> to vector<8x32xbf16>
    %c0_41 = arith.constant 0 : index
    %c0_42 = arith.constant 0 : index
    %131 = vector.load %arg8[%c0_41, %c0_42] : memref<32x32xbf16, #tpu.memory_space<vmem>>, vector<32x32xbf16>
    %cst_43 = arith.constant dense<0.000000e+00> : vector<8x32xf32>
    %132 = tpu.matmul %130, %131, %cst_43 {dimension_numbers = #tpu.dot_dimension_numbers<[1], [0], [0], [1], [0, 0, 1, 1], [], []>} : vector<8x32xbf16>, vector<32x32xbf16>, vector<8x32xf32> -> vector<8x32xf32>
    %133 = vector.broadcast %10 : vector<1x32xf32> to vector<8x32xf32>
    %134 = arith.addf %132, %133 : vector<8x32xf32>
    %cst_44 = arith.constant 0.000000e+00 : f32
    %135 = vector.broadcast %cst_44 : f32 to vector<8x32xf32>
    %136 = arith.maximumf %134, %135 : vector<8x32xf32>
    %137 = arith.truncf %136 : vector<8x32xf32> to vector<8x32xbf16>
    %c0_45 = arith.constant 0 : index
    %c0_46 = arith.constant 0 : index
    %138 = vector.load %arg9[%c0_45, %c0_46] : memref<32x128xbf16, #tpu.memory_space<vmem>>, vector<32x128xbf16>
    %cst_47 = arith.constant dense<0.000000e+00> : vector<8x128xf32>
    %139 = tpu.matmul %137, %138, %cst_47 {dimension_numbers = #tpu.dot_dimension_numbers<[1], [0], [0], [1], [0, 0, 1, 1], [], []>} : vector<8x32xbf16>, vector<32x128xbf16>, vector<8x128xf32> -> vector<8x128xf32>
    %140 = vector.broadcast %11 : vector<1x128xf32> to vector<8x128xf32>
    %141 = arith.addf %139, %140 : vector<8x128xf32>
    %c0_48 = arith.constant 0 : index
    %c0_49 = arith.constant 0 : index
    %142 = vector.load %arg11[%c0_48, %c0_49] : memref<8x128xf32, #tpu.memory_space<vmem>>, vector<8x128xf32>
    tpu.vector_store %arg11[%c0_48, %c0_49], %141 {strides = array<i32>} : memref<8x128xf32, #tpu.memory_space<vmem>>, vector<8x128xf32>,
    return
  }
  func.func @transform_0(%arg0: i32) -> (i32, i32, i32) {
    %c0_i32 = arith.constant 0 : i32
    %c0_i32_0 = arith.constant 0 : i32
    %c0_i32_1 = arith.constant 0 : i32
    %c0_i32_2 = arith.constant 0 : i32
    return %c0_i32, %c0_i32_0, %c0_i32_1 : i32, i32, i32
  }
  func.func @transform_1(%arg0: i32) -> (i32, i32, i32) {
    %c0_i32 = arith.constant 0 : i32
    %c0_i32_0 = arith.constant 0 : i32
    %c0_i32_1 = arith.constant 0 : i32
    %c0_i32_2 = arith.constant 0 : i32
    return %c0_i32, %c0_i32_0, %c0_i32_1 : i32, i32, i32
  }
  func.func @transform_2(%arg0: i32) -> (i32, i32) {
    %c0_i32 = arith.constant 0 : i32
    %c0_i32_0 = arith.constant 0 : i32
    %c0_i32_1 = arith.constant 0 : i32
    return %c0_i32, %c0_i32_0 : i32, i32
  }
  func.func @transform_3(%arg0: i32) -> (i32, i32) {
    %c0_i32 = arith.constant 0 : i32
    %c0_i32_0 = arith.constant 0 : i32
    %c0_i32_1 = arith.constant 0 : i32
    return %c0_i32, %c0_i32_0 : i32, i32
  }
  func.func @transform_4(%arg0: i32) -> (i32, i32) {
    %c0_i32 = arith.constant 0 : i32
    %c0_i32_0 = arith.constant 0 : i32
    %c0_i32_1 = arith.constant 0 : i32
    return %c0_i32, %c0_i32_0 : i32, i32
  }
  func.func @transform_5(%arg0: i32) -> (i32, i32) {
    %c0_i32 = arith.constant 0 : i32
    %c0_i32_0 = arith.constant 0 : i32
    %c0_i32_1 = arith.constant 0 : i32
    return %c0_i32, %c0_i32_0 : i32, i32
  }
  func.func @transform_6(%arg0: i32) -> (i32, i32) {
    %c0_i32 = arith.constant 0 : i32
    %c0_i32_0 = arith.constant 0 : i32
    %c0_i32_1 = arith.constant 0 : i32
    return %c0_i32, %c0_i32_0 : i32, i32
  }
  func.func @transform_7(%arg0: i32) -> (i32, i32) {
    %c0_i32 = arith.constant 0 : i32
    %c0_i32_0 = arith.constant 0 : i32
    %c0_i32_1 = arith.constant 0 : i32
    return %c0_i32, %c0_i32_0 : i32, i32
  }
  func.func @transform_8(%arg0: i32) -> (i32, i32) {
    %c0_i32 = arith.constant 0 : i32
    %c0_i32_0 = arith.constant 0 : i32
    %c0_i32_1 = arith.constant 0 : i32
    return %c0_i32, %c0_i32_0 : i32, i32
  }
  func.func @transform_9(%arg0: i32) -> (i32, i32) {
    %c0_i32 = arith.constant 0 : i32
    %c0_i32_0 = arith.constant 0 : i32
    %c0_i32_1 = arith.constant 0 : i32
    return %c0_i32, %c0_i32_0 : i32, i32
  }
  func.func @transform_10(%arg0: i32) -> (i32, i32) {
    %c0_i32 = arith.constant 0 : i32
    %c0_i32_0 = arith.constant 0 : i32
    %c0_i32_1 = arith.constant 0 : i32
    return %c0_i32, %c0_i32_0 : i32, i32
  }
}

</mosaic_0001>

<llo_original>
// kernel: galactic_nlp_forward.1
$region0: #{galactic_nlp_forward.1}
  #allocation0 [shape = 'u32[]', space=smem, size = 0x4, offset = 0x4, fixed_abs, tag = 'smem constant byte address 0x4 - core index']
  #allocation1 [shape = 'u32[72,128]{1,0:T(1,128)}', space=vmem, size = 0x9000, scoped, tag = 'internal scratch']
  %s0 = inlined_call_operand.vmem [shape: f32[8,8,32], index: 0, kind: input, shape index: {}]
  %s1 = inlined_call_operand.vmem [shape: f32[8,1,8], index: 1, kind: input, shape index: {}]
  %s2 = inlined_call_operand.vmem [shape: bf16[32,128], index: 2, kind: input, shape index: {}]
  %s3 = inlined_call_operand.vmem [shape: bf16[32,32], index: 3, kind: input, shape index: {}]
  %s4 = inlined_call_operand.vmem [shape: bf16[32,64], index: 4, kind: input, shape index: {}]
  %s5 = inlined_call_operand.vmem [shape: bf16[64,32], index: 5, kind: input, shape index: {}]
  %s6 = inlined_call_operand.vmem [shape: bf16[32,32], index: 6, kind: input, shape index: {}]
  %s7 = inlined_call_operand.vmem [shape: bf16[32,32], index: 7, kind: input, shape index: {}]
  %s8 = inlined_call_operand.vmem [shape: bf16[32,128], index: 8, kind: input, shape index: {}]
  %s9 = inlined_call_operand.vmem [shape: f32[9,128], index: 9, kind: input, shape index: {}]
  %s10 = inlined_call_operand.hbm [shape: f32[8,128], index: 10, kind: output, shape index: {}]
  %s11 = sld [smem:[#allocation0]]
  $region50: #{galactic_nlp_forward.1} parent=0
    _
  %s13 = ssub.s32 1, %s11
  %s14 = scalar_select 0, %s13, %s11
  $region1: #{galactic_nlp_forward.1} parent=0
    #allocation2 [shape = 'u8[4096]{0}', space=vmem, size = 0x1000, scoped, tag = 'output window, operand 0, single buffered']
    #allocation3 [shape = 's32[1]{0}', space=sflag, size = 0x4, scoped, tag = 'scoped memory for galactic_nlp_forward.1']
    %15 = vsyncpa [#allocation3], 0
    // Predicated region
    $region2: #{galactic_nlp_forward.1} parent=1 // pred_check
      _
    $region3: #{galactic_nlp_forward.1} parent=1 // pred_check_branch
      %17 = sbr.rel (0) target = $region5
    $region4: #{galactic_nlp_forward.1} parent=1 // pred_region
      _
    $region5: #{galactic_nlp_forward.1} parent=1 // pred_fallthru
      _
    // Predicated region
    $region6: #{galactic_nlp_forward.1} parent=1 // pred_check
      _
    $region7: #{galactic_nlp_forward.1} parent=1 // pred_check_branch
      %19 = sbr.rel (0) target = $region9
    $region8: #{galactic_nlp_forward.1} parent=1 // pred_region
      _
    $region9: #{galactic_nlp_forward.1} parent=1 // pred_fallthru
      _
    // Predicated region
    $region10: #{galactic_nlp_forward.1} parent=1 // pred_check
      _
    $region11: #{galactic_nlp_forward.1} parent=1 // pred_check_branch
      %21 = sbr.rel (0) target = $region13
    $region12: #{galactic_nlp_forward.1} parent=1 // pred_region
      _
    $region13: #{galactic_nlp_forward.1} parent=1 // pred_fallthru
      _
    // Predicated region
    $region14: #{galactic_nlp_forward.1} parent=1 // pred_check
      _
    $region15: #{galactic_nlp_forward.1} parent=1 // pred_check_branch
      %23 = sbr.rel (0) target = $region17
    $region16: #{galactic_nlp_forward.1} parent=1 // pred_region
      _
    $region17: #{galactic_nlp_forward.1} parent=1 // pred_fallthru
      _
    // Predicated region
    $region18: #{galactic_nlp_forward.1} parent=1 // pred_check
      _
    $region19: #{galactic_nlp_forward.1} parent=1 // pred_check_branch
      %25 = sbr.rel (0) target = $region21
    $region20: #{galactic_nlp_forward.1} parent=1 // pred_region
      _
    $region21: #{galactic_nlp_forward.1} parent=1 // pred_fallthru
      _
    // Predicated region
    $region22: #{galactic_nlp_forward.1} parent=1 // pred_check
      _
    $region23: #{galactic_nlp_forward.1} parent=1 // pred_check_branch
      %27 = sbr.rel (0) target = $region25
    $region24: #{galactic_nlp_forward.1} parent=1 // pred_region
      _
    $region25: #{galactic_nlp_forward.1} parent=1 // pred_fallthru
      _
    // Predicated region
    $region26: #{galactic_nlp_forward.1} parent=1 // pred_check
      _
    $region27: #{galactic_nlp_forward.1} parent=1 // pred_check_branch
      %29 = sbr.rel (0) target = $region29
    $region28: #{galactic_nlp_forward.1} parent=1 // pred_region
      _
    $region29: #{galactic_nlp_forward.1} parent=1 // pred_fallthru
      _
    // Predicated region
    $region30: #{galactic_nlp_forward.1} parent=1 // pred_check
      _
    $region31: #{galactic_nlp_forward.1} parent=1 // pred_check_branch
      %31 = sbr.rel (0) target = $region33
    $region32: #{galactic_nlp_forward.1} parent=1 // pred_region
      _
    $region33: #{galactic_nlp_forward.1} parent=1 // pred_fallthru
      _
    // Predicated region
    $region34: #{galactic_nlp_forward.1} parent=1 // pred_check
      _
    $region35: #{galactic_nlp_forward.1} parent=1 // pred_check_branch
      %33 = sbr.rel (0) target = $region37
    $region36: #{galactic_nlp_forward.1} parent=1 // pred_region
      _
    $region37: #{galactic_nlp_forward.1} parent=1 // pred_fallthru
      _
    // Predicated region
    $region38: #{galactic_nlp_forward.1} parent=1 // pred_check
      _
    $region39: #{galactic_nlp_forward.1} parent=1 // pred_check_branch
      %35 = sbr.rel (0) target = $region41
    $region40: #{galactic_nlp_forward.1} parent=1 // pred_region
      _
    $region41: #{galactic_nlp_forward.1} parent=1 // pred_fallthru
      _
    %v37 = vld [vmem:[%s0] sm:$0xff]
    %v38 = vld [vmem:[%s0 + $0x8] sm:$0xff]
    %v39 = vld [vmem:[%s0 + $0x10] sm:$0xff]
    %v40 = vld [vmem:[%s0 + $0x18] sm:$0xff]
    %v41 = vld [vmem:[%s0 + $0x20] sm:$0xff]
    %v42 = vld [vmem:[%s0 + $0x28] sm:$0xff]
    %v43 = vld [vmem:[%s0 + $0x30] sm:$0xff]
    %v44 = vld [vmem:[%s0 + $0x38] sm:$0xff]
    %v45 = vld [vmem:[%s1] sm:$0x1]
    %v46 = vld [vmem:[%s1 + $0x1] sm:$0x1]
    %v47 = vld [vmem:[%s1 + $0x2] sm:$0x1]
    %v48 = vld [vmem:[%s1 + $0x3] sm:$0x1]
    %v49 = vld [vmem:[%s1 + $0x4] sm:$0x1]
    %v50 = vld [vmem:[%s1 + $0x5] sm:$0x1]
    %v51 = vld [vmem:[%s1 + $0x6] sm:$0x1]
    %v52 = vld [vmem:[%s1 + $0x7] sm:$0x1]
    %v53 = vld [vmem:[%s9] sm:$0xff]
    %v54 = vld [vmem:[%s9 + $0x8] sm:$0x1]
    %v55 = vpack.c.bf16 %v38, %v37
    %v56 = vpack.c.bf16 %v40, %v39
    %v57 = vpack.c.bf16 %v42, %v41
    %v58 = vpack.c.bf16 %v44, %v43
    %v59 = vld [vmem:[%s2] sm:$0xf]
    %v60 = vld [vmem:[%s2 + $0x4] sm:$0xf]
    %v61 = vld [vmem:[%s2 + $0x8] sm:$0xf]
    %v62 = vld [vmem:[%s2 + $0xc] sm:$0xf]
    %v67 = vunpack.c.l.b16 %v59
    %v68 = vunpack.c.l.b16 %v60
    %v69 = vunpack.c.l.b16 %v61
    %v70 = vunpack.c.l.b16 %v62
    %v71 = vpack.c.b16 %v68, %v67
    %v72 = vpack.c.b16 %v70, %v69
    %vm75 = vcmask 261120
    %v77 = vsel %vm75, %v55, 0
    %v80 = vsel %vm75, %v56, 0
    %v83 = vsel %vm75, %v57, 0
    %v86 = vsel %vm75, %v58, 0
    %88 = vmatpush.bf16.msra.mxu0 0
    %89 = vmatpush.bf16.msra.mxu0 0
    %90 = vmatpush.bf16.msra.mxu0 0
    %91 = vmatpush.bf16.msra.mxu0 0
    %92 = vmatpush.bf16.msra.mxu0 0
    %93 = vmatpush.bf16.msra.mxu0 0
    %94 = vmatpush.bf16.msra.mxu0 %v72
    %95 = vmatpush.bf16.msra.mxu0 %v71
    %96 = vmatmul.bf16.gmra.mxu0 %v77
    %v97 = vpop.f32.mrf.mxu0
    %v98 = vadd.f32 0.0, %v97
    %v99 = vpop.f32.mrf.mxu0
    %v100 = vadd.f32 0.0, %v99
    %101 = vmatmul.bf16.gmra.mxu0 %v80
    %v102 = vpop.f32.mrf.mxu0
    %v103 = vadd.f32 0.0, %v102
    %v104 = vpop.f32.mrf.mxu0
    %v105 = vadd.f32 0.0, %v104
    %106 = vmatmul.bf16.gmra.mxu0 %v83
    %v107 = vpop.f32.mrf.mxu0
    %v108 = vadd.f32 0.0, %v107
    %v109 = vpop.f32.mrf.mxu0
    %v110 = vadd.f32 0.0, %v109
    %111 = vmatmul.bf16.gmra.mxu0 %v86
    %v112 = vpop.f32.mrf.mxu0
    %v113 = vadd.f32 0.0, %v112
    %v114 = vpop.f32.mrf.mxu0
    %v115 = vadd.f32 0.0, %v114
    %116 = vdwg.mxu0
    %v117 = vpack.c.bf16 %v98, %v98
    %v118 = vpack.c.bf16 %v100, %v100
    %v119 = vpack.c.bf16 %v103, %v103
    %v120 = vpack.c.bf16 %v105, %v105
    %v121 = vpack.c.bf16 %v108, %v108
    %v122 = vpack.c.bf16 %v110, %v110
    %v123 = vpack.c.bf16 %v113, %v113
    %v124 = vpack.c.bf16 %v115, %v115
    %v125 = vsub.f32 1.0, %v45
    %v126 = vsub.f32 1.0, %v46
    %v127 = vsub.f32 1.0, %v47
    %v128 = vsub.f32 1.0, %v48
    %v129 = vsub.f32 1.0, %v49
    %v130 = vsub.f32 1.0, %v50
    %v131 = vsub.f32 1.0, %v51
    %v132 = vsub.f32 1.0, %v52
    %v133 = vmul.f32 %v125, -1e+09
    %v134 = vmul.f32 %v126, -1e+09
    %v135 = vmul.f32 %v127, -1e+09
    %v136 = vmul.f32 %v128, -1e+09
    %v137 = vmul.f32 %v129, -1e+09
    %v138 = vmul.f32 %v130, -1e+09
    %v139 = vmul.f32 %v131, -1e+09
    %v140 = vmul.f32 %v132, -1e+09
    %v149 = vperm.slane %v133, 0
    %v150 = vperm.slane %v134, 0
    %v151 = vperm.slane %v135, 0
    %v152 = vperm.slane %v136, 0
    %v153 = vperm.slane %v137, 0
    %v154 = vperm.slane %v138, 0
    %v155 = vperm.slane %v139, 0
    %v156 = vperm.slane %v140, 0
    %v166 = vunpack.c.l.b16 %v117
    %v167 = vpack.c.b16 %v166, %v166
    %168 = vrot.lane.b32.xlu0 %v167, 96
    %v169 = vpop.permute.xlu0 %168
    %v171 = vsel %vm75, %v117, 0
    %v174 = vsel %vm75, %v169, 0
    %176 = vmatpush.bf16.xpose.msra.mxu0 0
    %177 = vmatpush.bf16.xpose.msra.mxu0 0
    %178 = vmatpush.bf16.xpose.msra.mxu0 0
    %179 = vmatpush.bf16.xpose.msra.mxu0 0
    %180 = vmatpush.bf16.xpose.msra.mxu0 0
    %181 = vmatpush.bf16.xpose.msra.mxu0 0
    %182 = vmatpush.bf16.xpose.msra.mxu0 0
    %183 = vmatpush.bf16.xpose.msra.mxu0 %v174
    %184 = vmatmul.bf16.gmra.mxu0 %v171
    %v185 = vpop.f32.mrf.mxu0
    %v186 = vadd.f32 %v149, %v185
    %v187 = vpop.f32.mrf.mxu0
    %188 = vdwg.mxu0
    %v190 = vunpack.c.l.b16 %v118
    %v191 = vpack.c.b16 %v190, %v190
    %192 = vrot.lane.b32.xlu0 %v191, 96
    %v193 = vpop.permute.xlu0 %192
    %v195 = vsel %vm75, %v118, 0
    %v198 = vsel %vm75, %v193, 0
    %200 = vmatpush.bf16.xpose.msra.mxu0 0
    %201 = vmatpush.bf16.xpose.msra.mxu0 0
    %202 = vmatpush.bf16.xpose.msra.mxu0 0
    %203 = vmatpush.bf16.xpose.msra.mxu0 0
    %204 = vmatpush.bf16.xpose.msra.mxu0 0
    %205 = vmatpush.bf16.xpose.msra.mxu0 0
    %206 = vmatpush.bf16.xpose.msra.mxu0 0
    %207 = vmatpush.bf16.xpose.msra.mxu0 %v198
    %208 = vmatmul.bf16.gmra.mxu0 %v195
    %v209 = vpop.f32.mrf.mxu0
    %v210 = vadd.f32 %v150, %v209
    %v211 = vpop.f32.mrf.mxu0
    %212 = vdwg.mxu0
    %v214 = vunpack.c.l.b16 %v119
    %v215 = vpack.c.b16 %v214, %v214
    %216 = vrot.lane.b32.xlu0 %v215, 96
    %v217 = vpop.permute.xlu0 %216
    %v219 = vsel %vm75, %v119, 0
    %v222 = vsel %vm75, %v217, 0
    %224 = vmatpush.bf16.xpose.msra.mxu0 0
    %225 = vmatpush.bf16.xpose.msra.mxu0 0
    %226 = vmatpush.bf16.xpose.msra.mxu0 0
    %227 = vmatpush.bf16.xpose.msra.mxu0 0
    %228 = vmatpush.bf16.xpose.msra.mxu0 0
    %229 = vmatpush.bf16.xpose.msra.mxu0 0
    %230 = vmatpush.bf16.xpose.msra.mxu0 0
    %231 = vmatpush.bf16.xpose.msra.mxu0 %v222
    %232 = vmatmul.bf16.gmra.mxu0 %v219
    %v233 = vpop.f32.mrf.mxu0
    %v234 = vadd.f32 %v151, %v233
    %v235 = vpop.f32.mrf.mxu0
    %236 = vdwg.mxu0
    %v238 = vunpack.c.l.b16 %v120
    %v239 = vpack.c.b16 %v238, %v238
    %240 = vrot.lane.b32.xlu0 %v239, 96
    %v241 = vpop.permute.xlu0 %240
    %v243 = vsel %vm75, %v120, 0
    %v246 = vsel %vm75, %v241, 0
    %248 = vmatpush.bf16.xpose.msra.mxu0 0
    %249 = vmatpush.bf16.xpose.msra.mxu0 0
    %250 = vmatpush.bf16.xpose.msra.mxu0 0
    %251 = vmatpush.bf16.xpose.msra.mxu0 0
    %252 = vmatpush.bf16.xpose.msra.mxu0 0
    %253 = vmatpush.bf16.xpose.msra.mxu0 0
    %254 = vmatpush.bf16.xpose.msra.mxu0 0
    %255 = vmatpush.bf16.xpose.msra.mxu0 %v246
    %256 = vmatmul.bf16.gmra.mxu0 %v243
    %v257 = vpop.f32.mrf.mxu0
    %v258 = vadd.f32 %v152, %v257
    %v259 = vpop.f32.mrf.mxu0
    %260 = vdwg.mxu0
    %v262 = vunpack.c.l.b16 %v121
    %v263 = vpack.c.b16 %v262, %v262
    %264 = vrot.lane.b32.xlu0 %v263, 96
    %v265 = vpop.permute.xlu0 %264
    %v267 = vsel %vm75, %v121, 0
    %v270 = vsel %vm75, %v265, 0
    %272 = vmatpush.bf16.xpose.msra.mxu0 0
    %273 = vmatpush.bf16.xpose.msra.mxu0 0
    %274 = vmatpush.bf16.xpose.msra.mxu0 0
    %275 = vmatpush.bf16.xpose.msra.mxu0 0
    %276 = vmatpush.bf16.xpose.msra.mxu0 0
    %277 = vmatpush.bf16.xpose.msra.mxu0 0
    %278 = vmatpush.bf16.xpose.msra.mxu0 0
    %279 = vmatpush.bf16.xpose.msra.mxu0 %v270
    %280 = vmatmul.bf16.gmra.mxu0 %v267
    %v281 = vpop.f32.mrf.mxu0
    %v282 = vadd.f32 %v153, %v281
    %v283 = vpop.f32.mrf.mxu0
    %284 = vdwg.mxu0
    %v286 = vunpack.c.l.b16 %v122
    %v287 = vpack.c.b16 %v286, %v286
    %288 = vrot.lane.b32.xlu0 %v287, 96
    %v289 = vpop.permute.xlu0 %288
    %v291 = vsel %vm75, %v122, 0
    %v294 = vsel %vm75, %v289, 0
    %296 = vmatpush.bf16.xpose.msra.mxu0 0
    %297 = vmatpush.bf16.xpose.msra.mxu0 0
    %298 = vmatpush.bf16.xpose.msra.mxu0 0
    %299 = vmatpush.bf16.xpose.msra.mxu0 0
    %300 = vmatpush.bf16.xpose.msra.mxu0 0
    %301 = vmatpush.bf16.xpose.msra.mxu0 0
    %302 = vmatpush.bf16.xpose.msra.mxu0 0
    %303 = vmatpush.bf16.xpose.msra.mxu0 %v294
    %304 = vmatmul.bf16.gmra.mxu0 %v291
    %v305 = vpop.f32.mrf.mxu0
    %v306 = vadd.f32 %v154, %v305
    %v307 = vpop.f32.mrf.mxu0
    %308 = vdwg.mxu0
    %v310 = vunpack.c.l.b16 %v123
    %v311 = vpack.c.b16 %v310, %v310
    %312 = vrot.lane.b32.xlu0 %v311, 96
    %v313 = vpop.permute.xlu0 %312
    %v315 = vsel %vm75, %v123, 0
    %v318 = vsel %vm75, %v313, 0
    %320 = vmatpush.bf16.xpose.msra.mxu0 0
    %321 = vmatpush.bf16.xpose.msra.mxu0 0
    %322 = vmatpush.bf16.xpose.msra.mxu0 0
    %323 = vmatpush.bf16.xpose.msra.mxu0 0
    %324 = vmatpush.bf16.xpose.msra.mxu0 0
    %325 = vmatpush.bf16.xpose.msra.mxu0 0
    %326 = vmatpush.bf16.xpose.msra.mxu0 0
    %327 = vmatpush.bf16.xpose.msra.mxu0 %v318
    %328 = vmatmul.bf16.gmra.mxu0 %v315
    %v329 = vpop.f32.mrf.mxu0
    %v330 = vadd.f32 %v155, %v329
    %v331 = vpop.f32.mrf.mxu0
    %332 = vdwg.mxu0
    %v334 = vunpack.c.l.b16 %v124
    %v335 = vpack.c.b16 %v334, %v334
    %336 = vrot.lane.b32.xlu0 %v335, 96
    %v337 = vpop.permute.xlu0 %336
    %v339 = vsel %vm75, %v124, 0
    %v342 = vsel %vm75, %v337, 0
    %344 = vmatpush.bf16.xpose.msra.mxu0 0
    %345 = vmatpush.bf16.xpose.msra.mxu0 0
    %346 = vmatpush.bf16.xpose.msra.mxu0 0
    %347 = vmatpush.bf16.xpose.msra.mxu0 0
    %348 = vmatpush.bf16.xpose.msra.mxu0 0
    %349 = vmatpush.bf16.xpose.msra.mxu0 0
    %350 = vmatpush.bf16.xpose.msra.mxu0 0
    %351 = vmatpush.bf16.xpose.msra.mxu0 %v342
    %352 = vmatmul.bf16.gmra.mxu0 %v339
    %v353 = vpop.f32.mrf.mxu0
    %v354 = vadd.f32 %v156, %v353
    %v355 = vpop.f32.mrf.mxu0
    %356 = vdwg.mxu0
    %vm357 = vcmask 64512
    %v358 = vsel %vm357, %v186, -inf
    %359 = vmax.xlane.f32.xlu0 %v358
    %v360 = vpop.xlane.xlu0 %359
    %v361 = vsel %vm357, %v210, -inf
    %362 = vmax.xlane.f32.xlu0 %v361
    %v363 = vpop.xlane.xlu0 %362
    %v364 = vsel %vm357, %v234, -inf
    %365 = vmax.xlane.f32.xlu0 %v364
    %v366 = vpop.xlane.xlu0 %365
    %v367 = vsel %vm357, %v258, -inf
    %368 = vmax.xlane.f32.xlu0 %v367
    %v369 = vpop.xlane.xlu0 %368
    %v370 = vsel %vm357, %v282, -inf
    %371 = vmax.xlane.f32.xlu0 %v370
    %v372 = vpop.xlane.xlu0 %371
    %v373 = vsel %vm357, %v306, -inf
    %374 = vmax.xlane.f32.xlu0 %v373
    %v375 = vpop.xlane.xlu0 %374
    %v376 = vsel %vm357, %v330, -inf
    %377 = vmax.xlane.f32.xlu0 %v376
    %v378 = vpop.xlane.xlu0 %377
    %v379 = vsel %vm357, %v354, -inf
    %380 = vmax.xlane.f32.xlu0 %v379
    %v381 = vpop.xlane.xlu0 %380
    %v382 = vsub.f32 %v186, %v360
    %v383 = vsub.f32 %v210, %v363
    %v384 = vsub.f32 %v234, %v366
    %v385 = vsub.f32 %v258, %v369
    %v386 = vsub.f32 %v282, %v372
    %v387 = vsub.f32 %v306, %v375
    %v388 = vsub.f32 %v330, %v378
    %v389 = vsub.f32 %v354, %v381
    %v390 = vmul.f32 %v382, 1.442695
    %v391 = vpow.pop %v390
    %v392 = vmul.f32 %v383, 1.442695
    %v393 = vpow.pop %v392
    %v394 = vmul.f32 %v384, 1.442695
    %v395 = vpow.pop %v394
    %v396 = vmul.f32 %v385, 1.442695
    %v397 = vpow.pop %v396
    %v398 = vmul.f32 %v386, 1.442695
    %v399 = vpow.pop %v398
    %v400 = vmul.f32 %v387, 1.442695
    %v401 = vpow.pop %v400
    %v402 = vmul.f32 %v388, 1.442695
    %v403 = vpow.pop %v402
    %v404 = vmul.f32 %v389, 1.442695
    %v405 = vpow.pop %v404
    %v406 = vsel %vm357, %v391, 0.0
    %407 = vadd.xlane.f32.xlu0 %v406
    %v408 = vpop.xlane.xlu0 %407
    %v409 = vsel %vm357, %v393, 0.0
    %410 = vadd.xlane.f32.xlu0 %v409
    %v411 = vpop.xlane.xlu0 %410
    %v412 = vsel %vm357, %v395, 0.0
    %413 = vadd.xlane.f32.xlu0 %v412
    %v414 = vpop.xlane.xlu0 %413
    %v415 = vsel %vm357, %v397, 0.0
    %416 = vadd.xlane.f32.xlu0 %v415
    %v417 = vpop.xlane.xlu0 %416
    %v418 = vsel %vm357, %v399, 0.0
    %419 = vadd.xlane.f32.xlu0 %v418
    %v420 = vpop.xlane.xlu0 %419
    %v421 = vsel %vm357, %v401, 0.0
    %422 = vadd.xlane.f32.xlu0 %v421
    %v423 = vpop.xlane.xlu0 %422
    %v424 = vsel %vm357, %v403, 0.0
    %425 = vadd.xlane.f32.xlu0 %v424
    %v426 = vpop.xlane.xlu0 %425
    %v427 = vsel %vm357, %v405, 0.0
    %428 = vadd.xlane.f32.xlu0 %v427
    %v429 = vpop.xlane.xlu0 %428
    %v430 = vrcp.pop %v408
    %v431 = vrcp.pop %v411
    %v432 = vrcp.pop %v414
    %v433 = vrcp.pop %v417
    %v434 = vrcp.pop %v420
    %v435 = vrcp.pop %v423
    %v436 = vrcp.pop %v426
    %v437 = vrcp.pop %v429
    %v438 = vmul.f32 %v391, %v430
    %v439 = vmul.f32 %v393, %v431
    %v440 = vmul.f32 %v395, %v432
    %v441 = vmul.f32 %v397, %v433
    %v442 = vmul.f32 %v399, %v434
    %v443 = vmul.f32 %v401, %v435
    %v444 = vmul.f32 %v403, %v436
    %v445 = vmul.f32 %v405, %v437
    %v446 = vpack.c.bf16 %v438, %v438
    %v447 = vpack.c.bf16 %v439, %v439
    %v448 = vpack.c.bf16 %v440, %v440
    %v449 = vpack.c.bf16 %v441, %v441
    %v450 = vpack.c.bf16 %v442, %v442
    %v451 = vpack.c.bf16 %v443, %v443
    %v452 = vpack.c.bf16 %v444, %v444
    %v453 = vpack.c.bf16 %v445, %v445
    %454 = vrot.lane.b32.xlu0 %v167, 64
    %v455 = vpop.permute.xlu0 %454
    %v457 = vsel %vm357, %v446, 0
    %vm459 = vcmask 1043456
    %v461 = vsel %vm459, %v455, 0
    %463 = vmatpush.bf16.msra.mxu0 0
    %464 = vmatpush.bf16.msra.mxu0 0
    %465 = vmatpush.bf16.msra.mxu0 0
    %466 = vmatpush.bf16.msra.mxu0 0
    %467 = vmatpush.bf16.msra.mxu0 0
    %468 = vmatpush.bf16.msra.mxu0 0
    %469 = vmatpush.bf16.msra.mxu0 0
    %470 = vmatpush.bf16.msra.mxu0 %v461
    %471 = vmatmul.bf16.gmra.mxu0 %v457
    %v472 = vpop.f32.mrf.mxu0
    %v473 = vadd.f32 0.0, %v472
    %v474 = vpop.f32.mrf.mxu0
    %475 = vdwg.mxu0
    %476 = vrot.lane.b32.xlu0 %v191, 64
    %v477 = vpop.permute.xlu0 %476
    %v479 = vsel %vm357, %v447, 0
    %v482 = vsel %vm459, %v477, 0
    %484 = vmatpush.bf16.msra.mxu0 0
    %485 = vmatpush.bf16.msra.mxu0 0
    %486 = vmatpush.bf16.msra.mxu0 0
    %487 = vmatpush.bf16.msra.mxu0 0
    %488 = vmatpush.bf16.msra.mxu0 0
    %489 = vmatpush.bf16.msra.mxu0 0
    %490 = vmatpush.bf16.msra.mxu0 0
    %491 = vmatpush.bf16.msra.mxu0 %v482
    %492 = vmatmul.bf16.gmra.mxu0 %v479
    %v493 = vpop.f32.mrf.mxu0
    %v494 = vadd.f32 0.0, %v493
    %v495 = vpop.f32.mrf.mxu0
    %496 = vdwg.mxu0
    %497 = vrot.lane.b32.xlu0 %v215, 64
    %v498 = vpop.permute.xlu0 %497
    %v500 = vsel %vm357, %v448, 0
    %v503 = vsel %vm459, %v498, 0
    %505 = vmatpush.bf16.msra.mxu0 0
    %506 = vmatpush.bf16.msra.mxu0 0
    %507 = vmatpush.bf16.msra.mxu0 0
    %508 = vmatpush.bf16.msra.mxu0 0
    %509 = vmatpush.bf16.msra.mxu0 0
    %510 = vmatpush.bf16.msra.mxu0 0
    %511 = vmatpush.bf16.msra.mxu0 0
    %512 = vmatpush.bf16.msra.mxu0 %v503
    %513 = vmatmul.bf16.gmra.mxu0 %v500
    %v514 = vpop.f32.mrf.mxu0
    %v515 = vadd.f32 0.0, %v514
    %v516 = vpop.f32.mrf.mxu0
    %517 = vdwg.mxu0
    %518 = vrot.lane.b32.xlu0 %v239, 64
    %v519 = vpop.permute.xlu0 %518
    %v521 = vsel %vm357, %v449, 0
    %v524 = vsel %vm459, %v519, 0
    %526 = vmatpush.bf16.msra.mxu0 0
    %527 = vmatpush.bf16.msra.mxu0 0
    %528 = vmatpush.bf16.msra.mxu0 0
    %529 = vmatpush.bf16.msra.mxu0 0
    %530 = vmatpush.bf16.msra.mxu0 0
    %531 = vmatpush.bf16.msra.mxu0 0
    %532 = vmatpush.bf16.msra.mxu0 0
    %533 = vmatpush.bf16.msra.mxu0 %v524
    %534 = vmatmul.bf16.gmra.mxu0 %v521
    %v535 = vpop.f32.mrf.mxu0
    %v536 = vadd.f32 0.0, %v535
    %v537 = vpop.f32.mrf.mxu0
    %538 = vdwg.mxu0
    %539 = vrot.lane.b32.xlu0 %v263, 64
    %v540 = vpop.permute.xlu0 %539
    %v542 = vsel %vm357, %v450, 0
    %v545 = vsel %vm459, %v540, 0
    %547 = vmatpush.bf16.msra.mxu0 0
    %548 = vmatpush.bf16.msra.mxu0 0
    %549 = vmatpush.bf16.msra.mxu0 0
    %550 = vmatpush.bf16.msra.mxu0 0
    %551 = vmatpush.bf16.msra.mxu0 0
    %552 = vmatpush.bf16.msra.mxu0 0
    %553 = vmatpush.bf16.msra.mxu0 0
    %554 = vmatpush.bf16.msra.mxu0 %v545
    %555 = vmatmul.bf16.gmra.mxu0 %v542
    %v556 = vpop.f32.mrf.mxu0
    %v557 = vadd.f32 0.0, %v556
    %v558 = vpop.f32.mrf.mxu0
    %559 = vdwg.mxu0
    %560 = vrot.lane.b32.xlu0 %v287, 64
    %v561 = vpop.permute.xlu0 %560
    %v563 = vsel %vm357, %v451, 0
    %v566 = vsel %vm459, %v561, 0
    %568 = vmatpush.bf16.msra.mxu0 0
    %569 = vmatpush.bf16.msra.mxu0 0
    %570 = vmatpush.bf16.msra.mxu0 0
    %571 = vmatpush.bf16.msra.mxu0 0
    %572 = vmatpush.bf16.msra.mxu0 0
    %573 = vmatpush.bf16.msra.mxu0 0
    %574 = vmatpush.bf16.msra.mxu0 0
    %575 = vmatpush.bf16.msra.mxu0 %v566
    %576 = vmatmul.bf16.gmra.mxu0 %v563
    %v577 = vpop.f32.mrf.mxu0
    %v578 = vadd.f32 0.0, %v577
    %v579 = vpop.f32.mrf.mxu0
    %580 = vdwg.mxu0
    %581 = vrot.lane.b32.xlu0 %v311, 64
    %v582 = vpop.permute.xlu0 %581
    %v584 = vsel %vm357, %v452, 0
    %v587 = vsel %vm459, %v582, 0
    %589 = vmatpush.bf16.msra.mxu0 0
    %590 = vmatpush.bf16.msra.mxu0 0
    %591 = vmatpush.bf16.msra.mxu0 0
    %592 = vmatpush.bf16.msra.mxu0 0
    %593 = vmatpush.bf16.msra.mxu0 0
    %594 = vmatpush.bf16.msra.mxu0 0
    %595 = vmatpush.bf16.msra.mxu0 0
    %596 = vmatpush.bf16.msra.mxu0 %v587
    %597 = vmatmul.bf16.gmra.mxu0 %v584
    %v598 = vpop.f32.mrf.mxu0
    %v599 = vadd.f32 0.0, %v598
    %v600 = vpop.f32.mrf.mxu0
    %601 = vdwg.mxu0
    %602 = vrot.lane.b32.xlu0 %v335, 64
    %v603 = vpop.permute.xlu0 %602
    %v605 = vsel %vm357, %v453, 0
    %v608 = vsel %vm459, %v603, 0
    %610 = vmatpush.bf16.msra.mxu0 0
    %611 = vmatpush.bf16.msra.mxu0 0
    %612 = vmatpush.bf16.msra.mxu0 0
    %613 = vmatpush.bf16.msra.mxu0 0
    %614 = vmatpush.bf16.msra.mxu0 0
    %615 = vmatpush.bf16.msra.mxu0 0
    %616 = vmatpush.bf16.msra.mxu0 0
    %617 = vmatpush.bf16.msra.mxu0 %v608
    %618 = vmatmul.bf16.gmra.mxu0 %v605
    %v619 = vpop.f32.mrf.mxu0
    %v620 = vadd.f32 0.0, %v619
    %v621 = vpop.f32.mrf.mxu0
    %622 = vdwg.mxu0
    %v623 = vpack.c.bf16 %v494, %v473
    %v624 = vpack.c.bf16 %v536, %v515
    %v625 = vpack.c.bf16 %v578, %v557
    %v626 = vpack.c.bf16 %v620, %v599
    %v627 = vld [vmem:[%s3] sm:$0xf]
    %v628 = vld [vmem:[%s3 + $0x4] sm:$0xf]
    %v629 = vld [vmem:[%s3 + $0x8] sm:$0xf]
    %v630 = vld [vmem:[%s3 + $0xc] sm:$0xf]
    %v635 = vunpack.c.l.b16 %v627
    %v636 = vunpack.c.l.b16 %v628
    %v637 = vunpack.c.l.b16 %v629
    %v638 = vunpack.c.l.b16 %v630
    %v639 = vpack.c.b16 %v636, %v635
    %v640 = vpack.c.b16 %v638, %v637
    %v644 = vsel %vm75, %v623, 0
    %v647 = vsel %vm75, %v624, 0
    %v650 = vsel %vm75, %v625, 0
    %v653 = vsel %vm75, %v626, 0
    %655 = vmatpush.bf16.msra.mxu0 0
    %656 = vmatpush.bf16.msra.mxu0 0
    %657 = vmatpush.bf16.msra.mxu0 0
    %658 = vmatpush.bf16.msra.mxu0 0
    %659 = vmatpush.bf16.msra.mxu0 0
    %660 = vmatpush.bf16.msra.mxu0 0
    %661 = vmatpush.bf16.msra.mxu0 %v640
    %662 = vmatpush.bf16.msra.mxu0 %v639
    %663 = vmatmul.bf16.gmra.mxu0 %v644
    %v664 = vpop.f32.mrf.mxu0
    %v665 = vadd.f32 0.0, %v664
    %v666 = vpop.f32.mrf.mxu0
    %v667 = vadd.f32 0.0, %v666
    %668 = vmatmul.bf16.gmra.mxu0 %v647
    %v669 = vpop.f32.mrf.mxu0
    %v670 = vadd.f32 0.0, %v669
    %v671 = vpop.f32.mrf.mxu0
    %v672 = vadd.f32 0.0, %v671
    %673 = vmatmul.bf16.gmra.mxu0 %v650
    %v674 = vpop.f32.mrf.mxu0
    %v675 = vadd.f32 0.0, %v674
    %v676 = vpop.f32.mrf.mxu0
    %v677 = vadd.f32 0.0, %v676
    %678 = vmatmul.bf16.gmra.mxu0 %v653
    %v679 = vpop.f32.mrf.mxu0
    %v680 = vadd.f32 0.0, %v679
    %v681 = vpop.f32.mrf.mxu0
    %v682 = vadd.f32 0.0, %v681
    %683 = vdwg.mxu0
    %v684 = vadd.f32 %v37, %v665
    %v685 = vadd.f32 %v38, %v667
    %v686 = vadd.f32 %v39, %v670
    %v687 = vadd.f32 %v40, %v672
    %v688 = vadd.f32 %v41, %v675
    %v689 = vadd.f32 %v42, %v677
    %v690 = vadd.f32 %v43, %v680
    %v691 = vadd.f32 %v44, %v682
    %v692 = vsel %vm75, %v684, 0.0
    %693 = vadd.xlane.f32.xlu0 %v692
    %v694 = vpop.xlane.xlu0 %693
    %v695 = vsel %vm75, %v685, 0.0
    %696 = vadd.xlane.f32.xlu0 %v695
    %v697 = vpop.xlane.xlu0 %696
    %v698 = vsel %vm75, %v686, 0.0
    %699 = vadd.xlane.f32.xlu0 %v698
    %v700 = vpop.xlane.xlu0 %699
    %v701 = vsel %vm75, %v687, 0.0
    %702 = vadd.xlane.f32.xlu0 %v701
    %v703 = vpop.xlane.xlu0 %702
    %v704 = vsel %vm75, %v688, 0.0
    %705 = vadd.xlane.f32.xlu0 %v704
    %v706 = vpop.xlane.xlu0 %705
    %v707 = vsel %vm75, %v689, 0.0
    %708 = vadd.xlane.f32.xlu0 %v707
    %v709 = vpop.xlane.xlu0 %708
    %v710 = vsel %vm75, %v690, 0.0
    %711 = vadd.xlane.f32.xlu0 %v710
    %v712 = vpop.xlane.xlu0 %711
    %v713 = vsel %vm75, %v691, 0.0
    %714 = vadd.xlane.f32.xlu0 %v713
    %v715 = vpop.xlane.xlu0 %714
    %v716 = vrcp.pop 32.0
    %v717 = vmul.f32 32.0, %v716
    %v718 = vsub.f32 1.0, %v717
    %v719 = vmul.f32 %v716, %v718
    %v720 = vadd.f32 %v716, %v719
    %vm721 = vweird.f32 %v716
    %v722 = vsel %vm721, %v716, %v720
    %v723 = vmul.f32 %v694, %v722
    %v724 = vmul.f32 %v697, %v722
    %v725 = vmul.f32 %v700, %v722
    %v726 = vmul.f32 %v703, %v722
    %v727 = vmul.f32 %v706, %v722
    %v728 = vmul.f32 %v709, %v722
    %v729 = vmul.f32 %v712, %v722
    %v730 = vmul.f32 %v715, %v722
    %v731 = vsub.f32 %v684, %v723
    %v732 = vsub.f32 %v685, %v724
    %v733 = vsub.f32 %v686, %v725
    %v734 = vsub.f32 %v687, %v726
    %v735 = vsub.f32 %v688, %v727
    %v736 = vsub.f32 %v689, %v728
    %v737 = vsub.f32 %v690, %v729
    %v738 = vsub.f32 %v691, %v730
    %v739 = vmul.f32 %v731, %v731
    %v740 = vmul.f32 %v732, %v732
    %v741 = vmul.f32 %v733, %v733
    %v742 = vmul.f32 %v734, %v734
    %v743 = vmul.f32 %v735, %v735
    %v744 = vmul.f32 %v736, %v736
    %v745 = vmul.f32 %v737, %v737
    %v746 = vmul.f32 %v738, %v738
    %v747 = vsel %vm75, %v739, 0.0
    %748 = vadd.xlane.f32.xlu0 %v747
    %v749 = vpop.xlane.xlu0 %748
    %v750 = vsel %vm75, %v740, 0.0
    %751 = vadd.xlane.f32.xlu0 %v750
    %v752 = vpop.xlane.xlu0 %751
    %v753 = vsel %vm75, %v741, 0.0
    %754 = vadd.xlane.f32.xlu0 %v753
    %v755 = vpop.xlane.xlu0 %754
    %v756 = vsel %vm75, %v742, 0.0
    %757 = vadd.xlane.f32.xlu0 %v756
    %v758 = vpop.xlane.xlu0 %757
    %v759 = vsel %vm75, %v743, 0.0
    %760 = vadd.xlane.f32.xlu0 %v759
    %v761 = vpop.xlane.xlu0 %760
    %v762 = vsel %vm75, %v744, 0.0
    %763 = vadd.xlane.f32.xlu0 %v762
    %v764 = vpop.xlane.xlu0 %763
    %v765 = vsel %vm75, %v745, 0.0
    %766 = vadd.xlane.f32.xlu0 %v765
    %v767 = vpop.xlane.xlu0 %766
    %v768 = vsel %vm75, %v746, 0.0
    %769 = vadd.xlane.f32.xlu0 %v768
    %v770 = vpop.xlane.xlu0 %769
    %v771 = vmul.f32 %v749, %v722
    %v772 = vmul.f32 %v752, %v722
    %v773 = vmul.f32 %v755, %v722
    %v774 = vmul.f32 %v758, %v722
    %v775 = vmul.f32 %v761, %v722
    %v776 = vmul.f32 %v764, %v722
    %v777 = vmul.f32 %v767, %v722
    %v778 = vmul.f32 %v770, %v722
    %v779 = vadd.f32 %v771, 1e-12
    %v780 = vadd.f32 %v772, 1e-12
    %v781 = vadd.f32 %v773, 1e-12
    %v782 = vadd.f32 %v774, 1e-12
    %v783 = vadd.f32 %v775, 1e-12
    %v784 = vadd.f32 %v776, 1e-12
    %v785 = vadd.f32 %v777, 1e-12
    %v786 = vadd.f32 %v778, 1e-12
    %v787 = vrsqrt.pop %v779
    %v788 = vmul.f32 %v787, %v779
    %v789 = vmul.f32 %v788, %v787
    %v790 = vmul.f32 0.5, %v789
    %v791 = vsub.f32 1.5, %v790
    %v792 = vmul.f32 %v787, %v791
    %vm793 = vweird.f32 %v779
    %vm794 = vweird.f32 %v787
    %vm795 = vmor %vm793, %vm794
    %v796 = vsel %vm795, %v787, %v792
    %v797 = vrsqrt.pop %v780
    %v798 = vmul.f32 %v797, %v780
    %v799 = vmul.f32 %v798, %v797
    %v800 = vmul.f32 0.5, %v799
    %v801 = vsub.f32 1.5, %v800
    %v802 = vmul.f32 %v797, %v801
    %vm803 = vweird.f32 %v780
    %vm804 = vweird.f32 %v797
    %vm805 = vmor %vm803, %vm804
    %v806 = vsel %vm805, %v797, %v802
    %v807 = vrsqrt.pop %v781
    %v808 = vmul.f32 %v807, %v781
    %v809 = vmul.f32 %v808, %v807
    %v810 = vmul.f32 0.5, %v809
    %v811 = vsub.f32 1.5, %v810
    %v812 = vmul.f32 %v807, %v811
    %vm813 = vweird.f32 %v781
    %vm814 = vweird.f32 %v807
    %vm815 = vmor %vm813, %vm814
    %v816 = vsel %vm815, %v807, %v812
    %v817 = vrsqrt.pop %v782
    %v818 = vmul.f32 %v817, %v782
    %v819 = vmul.f32 %v818, %v817
    %v820 = vmul.f32 0.5, %v819
    %v821 = vsub.f32 1.5, %v820
    %v822 = vmul.f32 %v817, %v821
    %vm823 = vweird.f32 %v782
    %vm824 = vweird.f32 %v817
    %vm825 = vmor %vm823, %vm824
    %v826 = vsel %vm825, %v817, %v822
    %v827 = vrsqrt.pop %v783
    %v828 = vmul.f32 %v827, %v783
    %v829 = vmul.f32 %v828, %v827
    %v830 = vmul.f32 0.5, %v829
    %v831 = vsub.f32 1.5, %v830
    %v832 = vmul.f32 %v827, %v831
    %vm833 = vweird.f32 %v783
    %vm834 = vweird.f32 %v827
    %vm835 = vmor %vm833, %vm834
    %v836 = vsel %vm835, %v827, %v832
    %v837 = vrsqrt.pop %v784
    %v838 = vmul.f32 %v837, %v784
    %v839 = vmul.f32 %v838, %v837
    %v840 = vmul.f32 0.5, %v839
    %v841 = vsub.f32 1.5, %v840
    %v842 = vmul.f32 %v837, %v841
    %vm843 = vweird.f32 %v784
    %vm844 = vweird.f32 %v837
    %vm845 = vmor %vm843, %vm844
    %v846 = vsel %vm845, %v837, %v842
    %v847 = vrsqrt.pop %v785
    %v848 = vmul.f32 %v847, %v785
    %v849 = vmul.f32 %v848, %v847
    %v850 = vmul.f32 0.5, %v849
    %v851 = vsub.f32 1.5, %v850
    %v852 = vmul.f32 %v847, %v851
    %vm853 = vweird.f32 %v785
    %vm854 = vweird.f32 %v847
    %vm855 = vmor %vm853, %vm854
    %v856 = vsel %vm855, %v847, %v852
    %v857 = vrsqrt.pop %v786
    %v858 = vmul.f32 %v857, %v786
    %v859 = vmul.f32 %v858, %v857
    %v860 = vmul.f32 0.5, %v859
    %v861 = vsub.f32 1.5, %v860
    %v862 = vmul.f32 %v857, %v861
    %vm863 = vweird.f32 %v786
    %vm864 = vweird.f32 %v857
    %vm865 = vmor %vm863, %vm864
    %v866 = vsel %vm865, %v857, %v862
    %v867 = vmul.f32 %v731, %v796
    %v868 = vmul.f32 %v732, %v806
    %v869 = vmul.f32 %v733, %v816
    %v870 = vmul.f32 %v734, %v826
    %v871 = vmul.f32 %v735, %v836
    %v872 = vmul.f32 %v736, %v846
    %v873 = vmul.f32 %v737, %v856
    %v874 = vmul.f32 %v738, %v866
    %v875 = vperm.slane %v53, 0
    %v876 = vmul.f32 %v867, %v875
    %v877 = vmul.f32 %v868, %v875
    %v878 = vmul.f32 %v869, %v875
    %v879 = vmul.f32 %v870, %v875
    %v880 = vmul.f32 %v871, %v875
    %v881 = vmul.f32 %v872, %v875
    %v882 = vmul.f32 %v873, %v875
    %v883 = vmul.f32 %v874, %v875
    %v884 = vperm.slane %v53, 1
    %v885 = vadd.f32 %v876, %v884
    %v886 = vadd.f32 %v877, %v884
    %v887 = vadd.f32 %v878, %v884
    %v888 = vadd.f32 %v879, %v884
    %v889 = vadd.f32 %v880, %v884
    %v890 = vadd.f32 %v881, %v884
    %v891 = vadd.f32 %v882, %v884
    %v892 = vadd.f32 %v883, %v884
    %v893 = vpack.c.bf16 %v886, %v885
    %v894 = vpack.c.bf16 %v888, %v887
    %v895 = vpack.c.bf16 %v890, %v889
    %v896 = vpack.c.bf16 %v892, %v891
    %v897 = vld [vmem:[%s4] sm:$0xf]
    %v898 = vld [vmem:[%s4 + $0x4] sm:$0xf]
    %v899 = vld [vmem:[%s4 + $0x8] sm:$0xf]
    %v900 = vld [vmem:[%s4 + $0xc] sm:$0xf]
    %v901 = vperm.slane %v53, 4
    %v906 = vunpack.c.l.b16 %v897
    %v907 = vunpack.c.l.b16 %v898
    %v908 = vunpack.c.l.b16 %v899
    %v909 = vunpack.c.l.b16 %v900
    %v910 = vpack.c.b16 %v907, %v906
    %v911 = vpack.c.b16 %v909, %v908
    %v915 = vsel %vm75, %v893, 0
    %v918 = vsel %vm75, %v894, 0
    %v921 = vsel %vm75, %v895, 0
    %v924 = vsel %vm75, %v896, 0
    %926 = vmatpush.bf16.msra.mxu0 0
    %927 = vmatpush.bf16.msra.mxu0 0
    %928 = vmatpush.bf16.msra.mxu0 0
    %929 = vmatpush.bf16.msra.mxu0 0
    %930 = vmatpush.bf16.msra.mxu0 0
    %931 = vmatpush.bf16.msra.mxu0 0
    %932 = vmatpush.bf16.msra.mxu0 %v911
    %933 = vmatpush.bf16.msra.mxu0 %v910
    %934 = vmatmul.bf16.gmra.mxu0 %v915
    %v935 = vpop.f32.mrf.mxu0
    %v936 = vadd.f32 %v901, %v935
    %v937 = vpop.f32.mrf.mxu0
    %v938 = vadd.f32 %v901, %v937
    %939 = vmatmul.bf16.gmra.mxu0 %v918
    %v940 = vpop.f32.mrf.mxu0
    %v941 = vadd.f32 %v901, %v940
    %v942 = vpop.f32.mrf.mxu0
    %v943 = vadd.f32 %v901, %v942
    %944 = vmatmul.bf16.gmra.mxu0 %v921
    %v945 = vpop.f32.mrf.mxu0
    %v946 = vadd.f32 %v901, %v945
    %v947 = vpop.f32.mrf.mxu0
    %v948 = vadd.f32 %v901, %v947
    %949 = vmatmul.bf16.gmra.mxu0 %v924
    %v950 = vpop.f32.mrf.mxu0
    %v951 = vadd.f32 %v901, %v950
    %v952 = vpop.f32.mrf.mxu0
    %v953 = vadd.f32 %v901, %v952
    %954 = vdwg.mxu0
    %v955 = vmul.f32 %v936, %v936
    %v956 = vmul.f32 %v938, %v938
    %v957 = vmul.f32 %v941, %v941
    %v958 = vmul.f32 %v943, %v943
    %v959 = vmul.f32 %v946, %v946
    %v960 = vmul.f32 %v948, %v948
    %v961 = vmul.f32 %v951, %v951
    %v962 = vmul.f32 %v953, %v953
    %v963 = vmul.f32 %v936, %v955
    %v964 = vmul.f32 %v938, %v956
    %v965 = vmul.f32 %v941, %v957
    %v966 = vmul.f32 %v943, %v958
    %v967 = vmul.f32 %v946, %v959
    %v968 = vmul.f32 %v948, %v960
    %v969 = vmul.f32 %v951, %v961
    %v970 = vmul.f32 %v953, %v962
    %v971 = vmul.f32 %v963, 0.044715
    %v972 = vmul.f32 %v964, 0.044715
    %v973 = vmul.f32 %v965, 0.044715
    %v974 = vmul.f32 %v966, 0.044715
    %v975 = vmul.f32 %v967, 0.044715
    %v976 = vmul.f32 %v968, 0.044715
    %v977 = vmul.f32 %v969, 0.044715
    %v978 = vmul.f32 %v970, 0.044715
    %v979 = vadd.f32 %v936, %v971
    %v980 = vadd.f32 %v938, %v972
    %v981 = vadd.f32 %v941, %v973
    %v982 = vadd.f32 %v943, %v974
    %v983 = vadd.f32 %v946, %v975
    %v984 = vadd.f32 %v948, %v976
    %v985 = vadd.f32 %v951, %v977
    %v986 = vadd.f32 %v953, %v978
    %v987 = vmul.f32 %v979, 0.7978846
    %v988 = vmul.f32 %v980, 0.7978846
    %v989 = vmul.f32 %v981, 0.7978846
    %v990 = vmul.f32 %v982, 0.7978846
    %v991 = vmul.f32 %v983, 0.7978846
    %v992 = vmul.f32 %v984, 0.7978846
    %v993 = vmul.f32 %v985, 0.7978846
    %v994 = vmul.f32 %v986, 0.7978846
    %v995 = vtanh.pop %v987
    %v996 = vtanh.pop %v988
    %v997 = vtanh.pop %v989
    %v998 = vtanh.pop %v990
    %v999 = vtanh.pop %v991
    %v1000 = vtanh.pop %v992
    %v1001 = vtanh.pop %v993
    %v1002 = vtanh.pop %v994
    %v1003 = vadd.f32 %v995, 1.0
    %v1004 = vadd.f32 %v996, 1.0
    %v1005 = vadd.f32 %v997, 1.0
    %v1006 = vadd.f32 %v998, 1.0
    %v1007 = vadd.f32 %v999, 1.0
    %v1008 = vadd.f32 %v1000, 1.0
    %v1009 = vadd.f32 %v1001, 1.0
    %v1010 = vadd.f32 %v1002, 1.0
    %v1011 = vmul.f32 %v1003, 0.5
    %v1012 = vmul.f32 %v1004, 0.5
    %v1013 = vmul.f32 %v1005, 0.5
    %v1014 = vmul.f32 %v1006, 0.5
    %v1015 = vmul.f32 %v1007, 0.5
    %v1016 = vmul.f32 %v1008, 0.5
    %v1017 = vmul.f32 %v1009, 0.5
    %v1018 = vmul.f32 %v1010, 0.5
    %v1019 = vmul.f32 %v936, %v1011
    %v1020 = vmul.f32 %v938, %v1012
    %v1021 = vmul.f32 %v941, %v1013
    %v1022 = vmul.f32 %v943, %v1014
    %v1023 = vmul.f32 %v946, %v1015
    %v1024 = vmul.f32 %v948, %v1016
    %v1025 = vmul.f32 %v951, %v1017
    %v1026 = vmul.f32 %v953, %v1018
    %v1027 = vpack.c.bf16 %v1020, %v1019
    %v1028 = vpack.c.bf16 %v1022, %v1021
    %v1029 = vpack.c.bf16 %v1024, %v1023
    %v1030 = vpack.c.bf16 %v1026, %v1025
    %v1031 = vld [vmem:[%s5] sm:$0xf]
    %v1032 = vld [vmem:[%s5 + $0x4] sm:$0xf]
    %v1033 = vld [vmem:[%s5 + $0x8] sm:$0xf]
    %v1034 = vld [vmem:[%s5 + $0xc] sm:$0xf]
    %v1035 = vld [vmem:[%s5 + $0x10] sm:$0xf]
    %v1036 = vld [vmem:[%s5 + $0x14] sm:$0xf]
    %v1037 = vld [vmem:[%s5 + $0x18] sm:$0xf]
    %v1038 = vld [vmem:[%s5 + $0x1c] sm:$0xf]
    %v1039 = vperm.slane %v53, 5
    %v1048 = vunpack.c.l.b16 %v1031
    %v1049 = vunpack.c.l.b16 %v1032
    %v1050 = vunpack.c.l.b16 %v1033
    %v1051 = vunpack.c.l.b16 %v1034
    %v1052 = vunpack.c.l.b16 %v1035
    %v1053 = vunpack.c.l.b16 %v1036
    %v1054 = vunpack.c.l.b16 %v1037
    %v1055 = vunpack.c.l.b16 %v1038
    %v1056 = vpack.c.b16 %v1049, %v1048
    %v1057 = vpack.c.b16 %v1051, %v1050
    %v1058 = vpack.c.b16 %v1053, %v1052
    %v1059 = vpack.c.b16 %v1055, %v1054
    %vm1064 = vcmask 523264
    %v1066 = vsel %vm1064, %v1027, 0
    %v1069 = vsel %vm1064, %v1028, 0
    %v1072 = vsel %vm1064, %v1029, 0
    %v1075 = vsel %vm1064, %v1030, 0
    %1077 = vmatpush.bf16.msra.mxu0 0
    %1078 = vmatpush.bf16.msra.mxu0 0
    %1079 = vmatpush.bf16.msra.mxu0 0
    %1080 = vmatpush.bf16.msra.mxu0 0
    %1081 = vmatpush.bf16.msra.mxu0 %v1059
    %1082 = vmatpush.bf16.msra.mxu0 %v1058
    %1083 = vmatpush.bf16.msra.mxu0 %v1057
    %1084 = vmatpush.bf16.msra.mxu0 %v1056
    %1085 = vmatmul.bf16.gmra.mxu0 %v1066
    %v1086 = vpop.f32.mrf.mxu0
    %v1087 = vadd.f32 %v1039, %v1086
    %v1088 = vpop.f32.mrf.mxu0
    %v1089 = vadd.f32 %v1039, %v1088
    %1090 = vmatmul.bf16.gmra.mxu0 %v1069
    %v1091 = vpop.f32.mrf.mxu0
    %v1092 = vadd.f32 %v1039, %v1091
    %v1093 = vpop.f32.mrf.mxu0
    %v1094 = vadd.f32 %v1039, %v1093
    %1095 = vmatmul.bf16.gmra.mxu0 %v1072
    %v1096 = vpop.f32.mrf.mxu0
    %v1097 = vadd.f32 %v1039, %v1096
    %v1098 = vpop.f32.mrf.mxu0
    %v1099 = vadd.f32 %v1039, %v1098
    %1100 = vmatmul.bf16.gmra.mxu0 %v1075
    %v1101 = vpop.f32.mrf.mxu0
    %v1102 = vadd.f32 %v1039, %v1101
    %v1103 = vpop.f32.mrf.mxu0
    %v1104 = vadd.f32 %v1039, %v1103
    %1105 = vdwg.mxu0
    %v1106 = vadd.f32 %v885, %v1087
    %v1107 = vadd.f32 %v886, %v1089
    %v1108 = vadd.f32 %v887, %v1092
    %v1109 = vadd.f32 %v888, %v1094
    %v1110 = vadd.f32 %v889, %v1097
    %v1111 = vadd.f32 %v890, %v1099
    %v1112 = vadd.f32 %v891, %v1102
    %v1113 = vadd.f32 %v892, %v1104
    %v1114 = vsel %vm75, %v1106, 0.0
    %1115 = vadd.xlane.f32.xlu0 %v1114
    %v1116 = vpop.xlane.xlu0 %1115
    %v1117 = vsel %vm75, %v1107, 0.0
    %1118 = vadd.xlane.f32.xlu0 %v1117
    %v1119 = vpop.xlane.xlu0 %1118
    %v1120 = vsel %vm75, %v1108, 0.0
    %1121 = vadd.xlane.f32.xlu0 %v1120
    %v1122 = vpop.xlane.xlu0 %1121
    %v1123 = vsel %vm75, %v1109, 0.0
    %1124 = vadd.xlane.f32.xlu0 %v1123
    %v1125 = vpop.xlane.xlu0 %1124
    %v1126 = vsel %vm75, %v1110, 0.0
    %1127 = vadd.xlane.f32.xlu0 %v1126
    %v1128 = vpop.xlane.xlu0 %1127
    %v1129 = vsel %vm75, %v1111, 0.0
    %1130 = vadd.xlane.f32.xlu0 %v1129
    %v1131 = vpop.xlane.xlu0 %1130
    %v1132 = vsel %vm75, %v1112, 0.0
    %1133 = vadd.xlane.f32.xlu0 %v1132
    %v1134 = vpop.xlane.xlu0 %1133
    %v1135 = vsel %vm75, %v1113, 0.0
    %1136 = vadd.xlane.f32.xlu0 %v1135
    %v1137 = vpop.xlane.xlu0 %1136
    %v1138 = vmul.f32 %v1116, %v722
    %v1139 = vmul.f32 %v1119, %v722
    %v1140 = vmul.f32 %v1122, %v722
    %v1141 = vmul.f32 %v1125, %v722
    %v1142 = vmul.f32 %v1128, %v722
    %v1143 = vmul.f32 %v1131, %v722
    %v1144 = vmul.f32 %v1134, %v722
    %v1145 = vmul.f32 %v1137, %v722
    %v1146 = vsub.f32 %v1106, %v1138
    %v1147 = vsub.f32 %v1107, %v1139
    %v1148 = vsub.f32 %v1108, %v1140
    %v1149 = vsub.f32 %v1109, %v1141
    %v1150 = vsub.f32 %v1110, %v1142
    %v1151 = vsub.f32 %v1111, %v1143
    %v1152 = vsub.f32 %v1112, %v1144
    %v1153 = vsub.f32 %v1113, %v1145
    %v1154 = vmul.f32 %v1146, %v1146
    %v1155 = vmul.f32 %v1147, %v1147
    %v1156 = vmul.f32 %v1148, %v1148
    %v1157 = vmul.f32 %v1149, %v1149
    %v1158 = vmul.f32 %v1150, %v1150
    %v1159 = vmul.f32 %v1151, %v1151
    %v1160 = vmul.f32 %v1152, %v1152
    %v1161 = vmul.f32 %v1153, %v1153
    %v1162 = vsel %vm75, %v1154, 0.0
    %1163 = vadd.xlane.f32.xlu0 %v1162
    %v1164 = vpop.xlane.xlu0 %1163
    %v1165 = vsel %vm75, %v1155, 0.0
    %1166 = vadd.xlane.f32.xlu0 %v1165
    %v1167 = vpop.xlane.xlu0 %1166
    %v1168 = vsel %vm75, %v1156, 0.0
    %1169 = vadd.xlane.f32.xlu0 %v1168
    %v1170 = vpop.xlane.xlu0 %1169
    %v1171 = vsel %vm75, %v1157, 0.0
    %1172 = vadd.xlane.f32.xlu0 %v1171
    %v1173 = vpop.xlane.xlu0 %1172
    %v1174 = vsel %vm75, %v1158, 0.0
    %1175 = vadd.xlane.f32.xlu0 %v1174
    %v1176 = vpop.xlane.xlu0 %1175
    %v1177 = vsel %vm75, %v1159, 0.0
    %1178 = vadd.xlane.f32.xlu0 %v1177
    %v1179 = vpop.xlane.xlu0 %1178
    %v1180 = vsel %vm75, %v1160, 0.0
    %1181 = vadd.xlane.f32.xlu0 %v1180
    %v1182 = vpop.xlane.xlu0 %1181
    %v1183 = vsel %vm75, %v1161, 0.0
    %1184 = vadd.xlane.f32.xlu0 %v1183
    %v1185 = vpop.xlane.xlu0 %1184
    %v1186 = vmul.f32 %v1164, %v722
    %v1187 = vmul.f32 %v1167, %v722
    %v1188 = vmul.f32 %v1170, %v722
    %v1189 = vmul.f32 %v1173, %v722
    %v1190 = vmul.f32 %v1176, %v722
    %v1191 = vmul.f32 %v1179, %v722
    %v1192 = vmul.f32 %v1182, %v722
    %v1193 = vmul.f32 %v1185, %v722
    %v1194 = vadd.f32 %v1186, 1e-12
    %v1195 = vadd.f32 %v1187, 1e-12
    %v1196 = vadd.f32 %v1188, 1e-12
    %v1197 = vadd.f32 %v1189, 1e-12
    %v1198 = vadd.f32 %v1190, 1e-12
    %v1199 = vadd.f32 %v1191, 1e-12
    %v1200 = vadd.f32 %v1192, 1e-12
    %v1201 = vadd.f32 %v1193, 1e-12
    %v1202 = vrsqrt.pop %v1194
    %v1203 = vmul.f32 %v1202, %v1194
    %v1204 = vmul.f32 %v1203, %v1202
    %v1205 = vmul.f32 0.5, %v1204
    %v1206 = vsub.f32 1.5, %v1205
    %v1207 = vmul.f32 %v1202, %v1206
    %vm1208 = vweird.f32 %v1194
    %vm1209 = vweird.f32 %v1202
    %vm1210 = vmor %vm1208, %vm1209
    %v1211 = vsel %vm1210, %v1202, %v1207
    %v1212 = vrsqrt.pop %v1195
    %v1213 = vmul.f32 %v1212, %v1195
    %v1214 = vmul.f32 %v1213, %v1212
    %v1215 = vmul.f32 0.5, %v1214
    %v1216 = vsub.f32 1.5, %v1215
    %v1217 = vmul.f32 %v1212, %v1216
    %vm1218 = vweird.f32 %v1195
    %vm1219 = vweird.f32 %v1212
    %vm1220 = vmor %vm1218, %vm1219
    %v1221 = vsel %vm1220, %v1212, %v1217
    %v1222 = vrsqrt.pop %v1196
    %v1223 = vmul.f32 %v1222, %v1196
    %v1224 = vmul.f32 %v1223, %v1222
    %v1225 = vmul.f32 0.5, %v1224
    %v1226 = vsub.f32 1.5, %v1225
    %v1227 = vmul.f32 %v1222, %v1226
    %vm1228 = vweird.f32 %v1196
    %vm1229 = vweird.f32 %v1222
    %vm1230 = vmor %vm1228, %vm1229
    %v1231 = vsel %vm1230, %v1222, %v1227
    %v1232 = vrsqrt.pop %v1197
    %v1233 = vmul.f32 %v1232, %v1197
    %v1234 = vmul.f32 %v1233, %v1232
    %v1235 = vmul.f32 0.5, %v1234
    %v1236 = vsub.f32 1.5, %v1235
    %v1237 = vmul.f32 %v1232, %v1236
    %vm1238 = vweird.f32 %v1197
    %vm1239 = vweird.f32 %v1232
    %vm1240 = vmor %vm1238, %vm1239
    %v1241 = vsel %vm1240, %v1232, %v1237
    %v1242 = vrsqrt.pop %v1198
    %v1243 = vmul.f32 %v1242, %v1198
    %v1244 = vmul.f32 %v1243, %v1242
    %v1245 = vmul.f32 0.5, %v1244
    %v1246 = vsub.f32 1.5, %v1245
    %v1247 = vmul.f32 %v1242, %v1246
    %vm1248 = vweird.f32 %v1198
    %vm1249 = vweird.f32 %v1242
    %vm1250 = vmor %vm1248, %vm1249
    %v1251 = vsel %vm1250, %v1242, %v1247
    %v1252 = vrsqrt.pop %v1199
    %v1253 = vmul.f32 %v1252, %v1199
    %v1254 = vmul.f32 %v1253, %v1252
    %v1255 = vmul.f32 0.5, %v1254
    %v1256 = vsub.f32 1.5, %v1255
    %v1257 = vmul.f32 %v1252, %v1256
    %vm1258 = vweird.f32 %v1199
    %vm1259 = vweird.f32 %v1252
    %vm1260 = vmor %vm1258, %vm1259
    %v1261 = vsel %vm1260, %v1252, %v1257
    %v1262 = vrsqrt.pop %v1200
    %v1263 = vmul.f32 %v1262, %v1200
    %v1264 = vmul.f32 %v1263, %v1262
    %v1265 = vmul.f32 0.5, %v1264
    %v1266 = vsub.f32 1.5, %v1265
    %v1267 = vmul.f32 %v1262, %v1266
    %vm1268 = vweird.f32 %v1200
    %vm1269 = vweird.f32 %v1262
    %vm1270 = vmor %vm1268, %vm1269
    %v1271 = vsel %vm1270, %v1262, %v1267
    %v1272 = vrsqrt.pop %v1201
    %v1273 = vmul.f32 %v1272, %v1201
    %v1274 = vmul.f32 %v1273, %v1272
    %v1275 = vmul.f32 0.5, %v1274
    %v1276 = vsub.f32 1.5, %v1275
    %v1277 = vmul.f32 %v1272, %v1276
    %vm1278 = vweird.f32 %v1201
    %vm1279 = vweird.f32 %v1272
    %vm1280 = vmor %vm1278, %vm1279
    %v1281 = vsel %vm1280, %v1272, %v1277
    %v1282 = vmul.f32 %v1146, %v1211
    %v1283 = vmul.f32 %v1147, %v1221
    %v1284 = vmul.f32 %v1148, %v1231
    %v1285 = vmul.f32 %v1149, %v1241
    %v1286 = vmul.f32 %v1150, %v1251
    %v1287 = vmul.f32 %v1151, %v1261
    %v1288 = vmul.f32 %v1152, %v1271
    %v1289 = vmul.f32 %v1153, %v1281
    %v1290 = vperm.slane %v53, 2
    %v1291 = vmul.f32 %v1282, %v1290
    %v1292 = vmul.f32 %v1283, %v1290
    %v1293 = vmul.f32 %v1284, %v1290
    %v1294 = vmul.f32 %v1285, %v1290
    %v1295 = vmul.f32 %v1286, %v1290
    %v1296 = vmul.f32 %v1287, %v1290
    %v1297 = vmul.f32 %v1288, %v1290
    %v1298 = vmul.f32 %v1289, %v1290
    %v1299 = vperm.slane %v53, 3
    %v1300 = vadd.f32 %v1291, %v1299
    %v1301 = vadd.f32 %v1292, %v1299
    %v1302 = vadd.f32 %v1293, %v1299
    %v1303 = vadd.f32 %v1294, %v1299
    %v1304 = vadd.f32 %v1295, %v1299
    %v1305 = vadd.f32 %v1296, %v1299
    %v1306 = vadd.f32 %v1297, %v1299
    %v1307 = vadd.f32 %v1298, %v1299
    %v1308 = vpack.c.bf16 %v1300, %v1300
    %v1309 = vpack.c.bf16 %v1301, %v1301
    %v1310 = vpack.c.bf16 %v1302, %v1302
    %v1311 = vpack.c.bf16 %v1303, %v1303
    %v1312 = vpack.c.bf16 %v1304, %v1304
    %v1313 = vpack.c.bf16 %v1305, %v1305
    %v1314 = vpack.c.bf16 %v1306, %v1306
    %v1315 = vpack.c.bf16 %v1307, %v1307
    %v1316 = vld [vmem:[%s6] sm:$0xf]
    %v1317 = vld [vmem:[%s6 + $0x4] sm:$0xf]
    %v1318 = vld [vmem:[%s6 + $0x8] sm:$0xf]
    %v1319 = vld [vmem:[%s6 + $0xc] sm:$0xf]
    %v1320 = vperm.slane %v53, 6
    %v1329 = vunpack.c.l.b16 %v1308
    %v1330 = vunpack.c.l.b16 %v1309
    %v1331 = vunpack.c.l.b16 %v1310
    %v1332 = vunpack.c.l.b16 %v1311
    %v1333 = vunpack.c.l.b16 %v1312
    %v1334 = vunpack.c.l.b16 %v1313
    %v1335 = vunpack.c.l.b16 %v1314
    %v1336 = vunpack.c.l.b16 %v1315
    %v1337 = vrot.slane %v1330, 7
    %vm1338 = vcmask 1041409
    %v1339 = vsel %vm1338, %v1337, %v1329
    %v1340 = vrot.slane %v1331, 6
    %vm1341 = vcmask 1042434
    %v1342 = vsel %vm1341, %v1340, %v1339
    %v1343 = vrot.slane %v1332, 5
    %vm1344 = vcmask 1043459
    %v1345 = vsel %vm1344, %v1343, %v1342
    %v1346 = vrot.slane %v1333, 4
    %vm1347 = vcmask 1044484
    %v1348 = vsel %vm1347, %v1346, %v1345
    %v1349 = vrot.slane %v1334, 3
    %vm1350 = vcmask 1045509
    %v1351 = vsel %vm1350, %v1349, %v1348
    %v1352 = vrot.slane %v1335, 2
    %vm1353 = vcmask 1046534
    %v1354 = vsel %vm1353, %v1352, %v1351
    %v1355 = vrot.slane %v1336, 1
    %vm1356 = vcmask 1047559
    %v1357 = vsel %vm1356, %v1355, %v1354
    %v1358 = vpack.c.b16 %v1357, %v1357
    %v1363 = vunpack.c.l.b16 %v1316
    %v1364 = vunpack.c.l.b16 %v1317
    %v1365 = vunpack.c.l.b16 %v1318
    %v1366 = vunpack.c.l.b16 %v1319
    %v1367 = vpack.c.b16 %v1364, %v1363
    %v1368 = vpack.c.b16 %v1366, %v1365
    %v1372 = vsel %vm75, %v1358, 0
    %1374 = vmatpush.bf16.msra.mxu0 0
    %1375 = vmatpush.bf16.msra.mxu0 0
    %1376 = vmatpush.bf16.msra.mxu0 0
    %1377 = vmatpush.bf16.msra.mxu0 0
    %1378 = vmatpush.bf16.msra.mxu0 0
    %1379 = vmatpush.bf16.msra.mxu0 0
    %1380 = vmatpush.bf16.msra.mxu0 %v1368
    %1381 = vmatpush.bf16.msra.mxu0 %v1367
    %1382 = vmatmul.bf16.gmra.mxu0 %v1372
    %v1383 = vpop.f32.mrf.mxu0
    %v1384 = vadd.f32 %v1320, %v1383
    %v1385 = vpop.f32.mrf.mxu0
    %1386 = vdwg.mxu0
    %v1387 = vtanh.pop %v1384
    %v1388 = vpack.c.bf16 %v1387, %v1387
    %v1389 = vld [vmem:[%s7] sm:$0xf]
    %v1390 = vld [vmem:[%s7 + $0x4] sm:$0xf]
    %v1391 = vld [vmem:[%s7 + $0x8] sm:$0xf]
    %v1392 = vld [vmem:[%s7 + $0xc] sm:$0xf]
    %v1393 = vperm.slane %v53, 7
    %v1398 = vunpack.c.l.b16 %v1389
    %v1399 = vunpack.c.l.b16 %v1390
    %v1400 = vunpack.c.l.b16 %v1391
    %v1401 = vunpack.c.l.b16 %v1392
    %v1402 = vpack.c.b16 %v1399, %v1398
    %v1403 = vpack.c.b16 %v1401, %v1400
    %v1407 = vsel %vm75, %v1388, 0
    %1409 = vmatpush.bf16.msra.mxu0 0
    %1410 = vmatpush.bf16.msra.mxu0 0
    %1411 = vmatpush.bf16.msra.mxu0 0
    %1412 = vmatpush.bf16.msra.mxu0 0
    %1413 = vmatpush.bf16.msra.mxu0 0
    %1414 = vmatpush.bf16.msra.mxu0 0
    %1415 = vmatpush.bf16.msra.mxu0 %v1403
    %1416 = vmatpush.bf16.msra.mxu0 %v1402
    %1417 = vmatmul.bf16.gmra.mxu0 %v1407
    %v1418 = vpop.f32.mrf.mxu0
    %v1419 = vadd.f32 %v1393, %v1418
    %v1420 = vpop.f32.mrf.mxu0
    %1421 = vdwg.mxu0
    %v1422 = vmax.f32 %v1419, 0.0
    %v1423 = vpack.c.bf16 %v1422, %v1422
    %v1424 = vld [vmem:[%s8] sm:$0xf]
    %v1425 = vld [vmem:[%s8 + $0x4] sm:$0xf]
    %v1426 = vld [vmem:[%s8 + $0x8] sm:$0xf]
    %v1427 = vld [vmem:[%s8 + $0xc] sm:$0xf]
    %v1428 = vperm.slane %v54, 0
    %v1433 = vunpack.c.l.b16 %v1424
    %v1434 = vunpack.c.l.b16 %v1425
    %v1435 = vunpack.c.l.b16 %v1426
    %v1436 = vunpack.c.l.b16 %v1427
    %v1437 = vpack.c.b16 %v1434, %v1433
    %v1438 = vpack.c.b16 %v1436, %v1435
    %v1442 = vsel %vm75, %v1423, 0
    %1444 = vmatpush.bf16.msra.mxu0 0
    %1445 = vmatpush.bf16.msra.mxu0 0
    %1446 = vmatpush.bf16.msra.mxu0 0
    %1447 = vmatpush.bf16.msra.mxu0 0
    %1448 = vmatpush.bf16.msra.mxu0 0
    %1449 = vmatpush.bf16.msra.mxu0 0
    %1450 = vmatpush.bf16.msra.mxu0 %v1438
    %1451 = vmatpush.bf16.msra.mxu0 %v1437
    %1452 = vmatmul.bf16.gmra.mxu0 %v1442
    %v1453 = vpop.f32.mrf.mxu0
    %v1454 = vadd.f32 %v1428, %v1453
    %v1455 = vpop.f32.mrf.mxu0
    %1456 = vdwg.mxu0
    %1457 = vst [vmem:[#allocation2] sm:$0xff] %v1454
    // Predicated region
    $region42: #{galactic_nlp_forward.1} parent=1 // pred_check
      _
    $region43: #{galactic_nlp_forward.1} parent=1 // pred_check_branch
      %1459 = sbr.rel (0) target = $region45
    $region44: #{galactic_nlp_forward.1} parent=1 // pred_region
      %1461 = vsyncadd [#allocation3], 0
      %s1463 = sshll.u32 [#allocation2], 4
      %s1464 = int_to_ptr.vmem [resolvable:$true] %s1463
      %s1465 = sshll.u32 %s10, 4
      %s1466 = int_to_ptr.hbm [resolvable:$true] %s1465
      %1468 = dma.vmem_to_hbm [thread:$0]  %s1464, 128, %s1466, [#allocation3]
    $region45: #{galactic_nlp_forward.1} parent=1 // pred_fallthru
      _
    // Predicated region
    $region46: #{galactic_nlp_forward.1} parent=1 // pred_check
      _
    $region47: #{galactic_nlp_forward.1} parent=1 // pred_check_branch
      %1470 = sbr.rel (0) target = $region49
    $region48: #{galactic_nlp_forward.1} parent=1 // pred_region
      %1472 = dma.done [#allocation3], 128
    $region49: #{galactic_nlp_forward.1} parent=1 // pred_fallthru
      _
    %1473 = vsyncpa [#allocation3], 1

</llo_original>
